<compile_context>
chip_gen: v7x
topology: tpu7x:2x2x1
jax: 0.10.0
libtpu: 0.0.40
codegen_flags: <defaults>
</compile_context>

<pallas_src>
import functools

import jax
import jax.numpy as jnp
from jax.experimental import pallas as pl
from jax.experimental.pallas import tpu as pltpu


def _mlp_kernel(x_ref, w1_ref, b1_ref, w2_ref, b2_ref, o_ref):
    # x_ref:  (TB, 768)  f32   (cast to bf16 here, under the MXU)
    # w1_ref: (768, 512) bf16  b1_ref: (1, 512) f32
    # w2_ref: (512, 256) bf16  b2_ref: (1, 256) f32
    # o_ref:  (TB, 256)  f32 (or bf16 if requested)
    x = x_ref[...].astype(jnp.bfloat16)
    h = jnp.dot(x, w1_ref[...], preferred_element_type=jnp.float32)
    h = jnp.maximum(h + b1_ref[...], 0.0)                      # bias + ReLU in f32 (VPU)
    y = jnp.dot(h.astype(jnp.bfloat16), w2_ref[...],
                preferred_element_type=jnp.float32)
    o_ref[...] = (y + b2_ref[...]).astype(o_ref.dtype)


def _round_up(n, m):
    return ((n + m - 1) // m) * m


_MAX_WASTE = 0.125  # tolerated fraction of padded (garbage) rows


def _select_tile(B):
    """Return (tb, b_pad). Prefers large tiles with >=2 grid steps and low pad waste."""
    b8 = _round_up(B, 8)
    if b8 <= 128:
        return b8, b8                                  # tiny batch: one 8-row-aligned tile
    # Largest tile first so per-step pipeline overhead is amortized, but require >=2 grid
    # steps (v7x megacore) and bounded padding waste.
    for tb in (1024, 512, 256, 128):
        b_pad = _round_up(b8, tb)
        if b_pad // tb >= 2 and (b_pad - B) / b_pad <= _MAX_WASTE:
            return tb, b_pad
    # Next best: a single big tile with bounded waste.
    for tb in (1024, 512, 256, 128):
        b_pad = _round_up(b8, tb)
        if b_pad // tb == 1 and (b_pad - B) / b_pad <= _MAX_WASTE:
            return tb, b_pad
    # Awkward ragged size (only reachable for B <= ~1023): one whole-batch tile, 8-row aligned
    # (native f32 sublane granularity), which minimizes wasted rows.
    return b8, b8


def prepare_params(w1, b1, w2, b2):
    """Convert parameters ONCE (store and reuse): bf16 weights (in, out), f32 row biases."""
    d_hid = w1.shape[1]
    d_out = w2.shape[1]
    return (
        jnp.asarray(w1, dtype=jnp.bfloat16),
        jnp.reshape(jnp.asarray(b1, dtype=jnp.float32), (1, d_hid)),
        jnp.asarray(w2, dtype=jnp.bfloat16),
        jnp.reshape(jnp.asarray(b2, dtype=jnp.float32), (1, d_out)),
    )


@functools.partial(jax.jit, static_argnames=("out_dtype",))
def embedding_network_forward(x, params, *, out_dtype=jnp.float32):
    """x: (B, embedding_dim) f32. params from prepare_params(). y = relu(x@W1+b1)@W2+b2."""
    w1b, b1f, w2b, b2f = params
    B, d_in = x.shape
    d_hid = w1b.shape[1]
    d_out = w2b.shape[1]

    tb, b_pad = _select_tile(B)
    xf = x.astype(jnp.float32)
    if b_pad != B:
        xf = jnp.pad(xf, ((0, b_pad - B), (0, 0)))

    flops = 2 * b_pad * (d_in * d_hid + d_hid * d_out)
    bytes_accessed = (xf.size * 4 + w1b.size * 2 + w2b.size * 2
                      + b1f.size * 4 + b2f.size * 4
                      + b_pad * d_out * jnp.dtype(out_dtype).itemsize)
    cost = pl.CostEstimate(flops=flops, transcendentals=0,
                           bytes_accessed=bytes_accessed)

    out = pl.pallas_call(
        _mlp_kernel,
        out_shape=jax.ShapeDtypeStruct((b_pad, d_out), out_dtype),
        grid_spec=pltpu.PrefetchScalarGridSpec(
            num_scalar_prefetch=0,
            grid=(b_pad // tb,),
            in_specs=[
                pl.BlockSpec((tb, d_in), lambda i: (i, 0)),      # x tile per grid step
                pl.BlockSpec((d_in, d_hid), lambda i: (0, 0)),   # W1 (resident)
                pl.BlockSpec((1, d_hid), lambda i: (0, 0)),      # b1
                pl.BlockSpec((d_hid, d_out), lambda i: (0, 0)),  # W2 (resident)
                pl.BlockSpec((1, d_out), lambda i: (0, 0)),      # b2
            ],
            out_specs=pl.BlockSpec((tb, d_out), lambda i: (i, 0)),
        ),
        compiler_params=pltpu.CompilerParams(
            dimension_semantics=("parallel",),        # batch tiles shard across TCs (v7x)
            vmem_limit_bytes=32 * 1024 * 1024,        # covers tb=1024 f32 tiles on v5e too
        ),
        cost_estimate=cost,
    )(xf, w1b, b1f, w2b, b2f)
    return out[:B] if b_pad != B else out


def reference_forward_f32(x, w1, b1, w2, b2):
    h = jnp.maximum(x @ w1 + b1, 0.0)
    return h @ w2 + b2


def reference_forward_bf16(x, w1, b1, w2, b2):
    # Mirrors the kernel's bf16-operand / f32-accumulation numerics.
    h = jnp.dot(x.astype(jnp.bfloat16), w1.astype(jnp.bfloat16),
                preferred_element_type=jnp.float32)
    h = jnp.maximum(h + b1, 0.0)
    y = jnp.dot(h.astype(jnp.bfloat16), w2.astype(jnp.bfloat16),
                preferred_element_type=jnp.float32)
    return y + b2


if __name__ == "__main__":
    embedding_dim = 768
    hidden_dim = 512
    output_dim = 256
    batch = 8

    key = jax.random.PRNGKey(0)
    kx, k1, kb1, k2, kb2, kx2, kx3 = jax.random.split(key, 7)

    # PyTorch Linear weights are (out, in); stored here transposed as (in, out) for x @ W.
    x = jax.random.normal(kx, (batch, embedding_dim), dtype=jnp.float32)
    w1 = jax.random.normal(k1, (embedding_dim, hidden_dim), dtype=jnp.float32) * 0.02
    b1 = jax.random.normal(kb1, (1, hidden_dim), dtype=jnp.float32) * 0.02
    w2 = jax.random.normal(k2, (hidden_dim, output_dim), dtype=jnp.float32) * 0.02
    b2 = jax.random.normal(kb2, (1, output_dim), dtype=jnp.float32) * 0.02

    params = prepare_params(w1, b1, w2, b2)   # one-time bf16 weight conversion

    out = jax.block_until_ready(embedding_network_forward(x, params))
    assert out.shape == (batch, output_dim)
    ref_bf16 = jax.block_until_ready(reference_forward_bf16(x, w1, b1, w2, b2))
    ref_f32 = jax.block_until_ready(reference_forward_f32(x, w1, b1, w2, b2))
    assert jnp.allclose(out, ref_bf16, atol=1e-2, rtol=1e-2), "mismatch vs bf16 reference"
    assert jnp.allclose(out, ref_f32, atol=5e-2, rtol=5e-2), "mismatch vs f32 reference"

    # Ragged tiny batch (not a multiple of 8) -> single 40-row tile, minimal padding.
    x_ragged = jax.random.normal(kx2, (37, embedding_dim), dtype=jnp.float32)
    out_r = jax.block_until_ready(embedding_network_forward(x_ragged, params))
    ref_r = jax.block_until_ready(reference_forward_bf16(x_ragged, w1, b1, w2, b2))
    assert out_r.shape == (37, output_dim)
    assert jnp.allclose(out_r, ref_r, atol=1e-2, rtol=1e-2), "ragged mismatch vs bf16 reference"

    # Awkward mid-size batch -> whole-batch fallback tile (avoids ~40% padding waste).
    x_mid = jax.random.normal(kx3, (300, embedding_dim), dtype=jnp.float32)
    out_m = jax.block_until_ready(embedding_network_forward(x_mid, params))
    ref_m = jax.block_until_ready(reference_forward_bf16(x_mid, w1, b1, w2, b2))
    assert out_m.shape == (300, output_dim)
    assert jnp.allclose(out_m, ref_m, atol=1e-2, rtol=1e-2), "mid-size mismatch vs bf16 reference"

    print("KERNEL_OK")
</pallas_src>

<mosaic_0001>
module attributes {stable_mosaic.version = 11 : i64} {
  func.func @_mlp_kernel(%arg0: i32, %arg1: memref<8x768xf32, #tpu.memory_space<vmem>>, %arg2: memref<768x512xbf16, #tpu.memory_space<vmem>>, %arg3: memref<1x512xf32, #tpu.memory_space<vmem>>, %arg4: memref<512x256xbf16, #tpu.memory_space<vmem>>, %arg5: memref<1x256xf32, #tpu.memory_space<vmem>>, %arg6: memref<8x256xf32, #tpu.memory_space<vmem>>) attributes {dimension_semantics = [#tpu.dimension_semantics<parallel>], iteration_bounds = array<i64: 1>, scalar_prefetch = 0 : i64, scratch_operands = 0 : i64, tpu.core_type = #tpu.core_type<tc>, window_params = [{transform_indices = @transform_0, window_bounds = array<i64: 8, 768>}, {pipeline_mode = #tpu.pipeline_mode<synchronous>, transform_indices = @transform_1, window_bounds = array<i64: 768, 512>}, {pipeline_mode = #tpu.pipeline_mode<synchronous>, transform_indices = @transform_2, window_bounds = array<i64: 1, 512>}, {pipeline_mode = #tpu.pipeline_mode<synchronous>, transform_indices = @transform_3, window_bounds = array<i64: 512, 256>}, {pipeline_mode = #tpu.pipeline_mode<synchronous>, transform_indices = @transform_4, window_bounds = array<i64: 1, 256>}, {transform_indices = @transform_5, window_bounds = array<i64: 8, 256>}]} {
    %c0 = arith.constant 0 : index
    %c0_0 = arith.constant 0 : index
    %0 = vector.load %arg1[%c0, %c0_0] : memref<8x768xf32, #tpu.memory_space<vmem>>, vector<8x768xf32>
    %1 = arith.truncf %0 : vector<8x768xf32> to vector<8x768xbf16>
    %c0_1 = arith.constant 0 : index
    %c0_2 = arith.constant 0 : index
    %2 = vector.load %arg2[%c0_1, %c0_2] : memref<768x512xbf16, #tpu.memory_space<vmem>>, vector<768x512xbf16>
    %cst = arith.constant dense<0.000000e+00> : vector<8x512xf32>
    %3 = tpu.matmul %1, %2, %cst {dimension_numbers = #tpu.dot_dimension_numbers<[1], [0], [0], [1], [0, 0, 1, 1], [], []>} : vector<8x768xbf16>, vector<768x512xbf16>, vector<8x512xf32> -> vector<8x512xf32>
    %c0_3 = arith.constant 0 : index
    %c0_4 = arith.constant 0 : index
    %4 = vector.load %arg3[%c0_3, %c0_4] : memref<1x512xf32, #tpu.memory_space<vmem>>, vector<1x512xf32>
    %5 = vector.broadcast %4 : vector<1x512xf32> to vector<8x512xf32>
    %6 = arith.addf %3, %5 : vector<8x512xf32>
    %cst_5 = arith.constant 0.000000e+00 : f32
    %7 = vector.broadcast %cst_5 : f32 to vector<8x512xf32>
    %8 = arith.maximumf %6, %7 : vector<8x512xf32>
    %9 = arith.truncf %8 : vector<8x512xf32> to vector<8x512xbf16>
    %c0_6 = arith.constant 0 : index
    %c0_7 = arith.constant 0 : index
    %10 = vector.load %arg4[%c0_6, %c0_7] : memref<512x256xbf16, #tpu.memory_space<vmem>>, vector<512x256xbf16>
    %cst_8 = arith.constant dense<0.000000e+00> : vector<8x256xf32>
    %11 = tpu.matmul %9, %10, %cst_8 {dimension_numbers = #tpu.dot_dimension_numbers<[1], [0], [0], [1], [0, 0, 1, 1], [], []>} : vector<8x512xbf16>, vector<512x256xbf16>, vector<8x256xf32> -> vector<8x256xf32>
    %c0_9 = arith.constant 0 : index
    %c0_10 = arith.constant 0 : index
    %12 = vector.load %arg5[%c0_9, %c0_10] : memref<1x256xf32, #tpu.memory_space<vmem>>, vector<1x256xf32>
    %13 = vector.broadcast %12 : vector<1x256xf32> to vector<8x256xf32>
    %14 = arith.addf %11, %13 : vector<8x256xf32>
    %c0_11 = arith.constant 0 : index
    %c0_12 = arith.constant 0 : index
    %15 = vector.load %arg6[%c0_11, %c0_12] : memref<8x256xf32, #tpu.memory_space<vmem>>, vector<8x256xf32>
    tpu.vector_store %arg6[%c0_11, %c0_12], %14 {strides = array<i32>} : memref<8x256xf32, #tpu.memory_space<vmem>>, vector<8x256xf32>,
    return
  }
  func.func @transform_0(%arg0: i32) -> (i32, i32) {
    %c0_i32 = arith.constant 0 : i32
    %c0_i32_0 = arith.constant 0 : i32
    return %arg0, %c0_i32 : i32, i32
  }
  func.func @transform_1(%arg0: i32) -> (i32, i32) {
    %c0_i32 = arith.constant 0 : i32
    %c0_i32_0 = arith.constant 0 : i32
    %c0_i32_1 = arith.constant 0 : i32
    return %c0_i32, %c0_i32_0 : i32, i32
  }
  func.func @transform_2(%arg0: i32) -> (i32, i32) {
    %c0_i32 = arith.constant 0 : i32
    %c0_i32_0 = arith.constant 0 : i32
    %c0_i32_1 = arith.constant 0 : i32
    return %c0_i32, %c0_i32_0 : i32, i32
  }
  func.func @transform_3(%arg0: i32) -> (i32, i32) {
    %c0_i32 = arith.constant 0 : i32
    %c0_i32_0 = arith.constant 0 : i32
    %c0_i32_1 = arith.constant 0 : i32
    return %c0_i32, %c0_i32_0 : i32, i32
  }
  func.func @transform_4(%arg0: i32) -> (i32, i32) {
    %c0_i32 = arith.constant 0 : i32
    %c0_i32_0 = arith.constant 0 : i32
    %c0_i32_1 = arith.constant 0 : i32
    return %c0_i32, %c0_i32_0 : i32, i32
  }
  func.func @transform_5(%arg0: i32) -> (i32, i32) {
    %c0_i32 = arith.constant 0 : i32
    %c0_i32_0 = arith.constant 0 : i32
    return %arg0, %c0_i32 : i32, i32
  }
}

</mosaic_0001>

<llo_original>
// kernel: embedding_network_forward.1
$region0: #{embedding_network_forward.1}
  #allocation0 [shape = 'u32[]', space=smem, size = 0x4, offset = 0x4, fixed_abs, tag = 'smem constant byte address 0x4 - core index']
  #allocation1 [shape = 'u32[144,128]{1,0:T(1,128)}', space=vmem, size = 0x12000, scoped, tag = 'internal scratch']
  %s0 = inlined_call_operand.hbm [shape: f32[8,768], index: 0, kind: input, shape index: {}]
  %s1 = inlined_call_operand.hbm [shape: bf16[768,512], index: 1, kind: input, shape index: {}]
  %s2 = inlined_call_operand.vmem [shape: f32[1,512], index: 2, kind: input, shape index: {}]
  %s3 = inlined_call_operand.hbm [shape: bf16[512,256], index: 3, kind: input, shape index: {}]
  %s4 = inlined_call_operand.vmem [shape: f32[1,256], index: 4, kind: input, shape index: {}]
  %s5 = inlined_call_operand.hbm [shape: f32[8,256], index: 5, kind: output, shape index: {}]
  %s6 = sld [smem:[#allocation0]]
  $region42: #{embedding_network_forward.1} parent=0
    _
  %s8 = ssub.s32 1, %s6
  %s9 = scalar_select 0, %s8, %s6
  $region1: #{embedding_network_forward.1} parent=0
    #allocation2 [shape = 'u8[24576]{0}', space=vmem, size = 0x6000, scoped, tag = 'input window, operand 0, single buffered']
    #allocation3 [shape = 's32[1]{0}', space=sflag, size = 0x4, scoped, tag = 'scoped memory for embedding_network_forward.1']
    #allocation4 [shape = 's32[1]{0}', space=sflag, size = 0x4, scoped, tag = 'scoped memory for embedding_network_forward.1']
    #allocation5 [shape = 'u8[786432]{0}', space=vmem, size = 0xc0000, scoped, tag = 'input window, operand 1, single buffered']
    #allocation6 [shape = 's32[1]{0}', space=sflag, size = 0x4, scoped, tag = 'scoped memory for embedding_network_forward.1']
    #allocation7 [shape = 'u8[262144]{0}', space=vmem, size = 0x40000, scoped, tag = 'input window, operand 3, single buffered']
    #allocation8 [shape = 'u8[8192]{0}', space=vmem, size = 0x2000, scoped, tag = 'output window, operand 0, single buffered']
    %10 = vsyncpa [#allocation3], 0
    %11 = vsyncpa [#allocation6], 0
    %12 = vsyncpa [#allocation4], 0
    // Predicated region
    $region2: #{embedding_network_forward.1} parent=1 // pred_check
      _
    $region3: #{embedding_network_forward.1} parent=1 // pred_check_branch
      %14 = sbr.rel (0) target = $region5
    $region4: #{embedding_network_forward.1} parent=1 // pred_region
      %s16 = ssub.s32 768, 768
      %17 = vsyncadd [#allocation3], %s16
      %s19 = sshll.u32 [#allocation2], 4
      %s20 = int_to_ptr.vmem [resolvable:$true] %s19
      %22 = dma.hbm_to_vmem [thread:$0]  %s0, 768, %s20, [#allocation3]
    $region5: #{embedding_network_forward.1} parent=1 // pred_fallthru
      _
    // Predicated region
    $region6: #{embedding_network_forward.1} parent=1 // pred_check
      _
    $region7: #{embedding_network_forward.1} parent=1 // pred_check_branch
      %24 = sbr.rel (0) target = $region9
    $region8: #{embedding_network_forward.1} parent=1 // pred_region
      %s26 = ssub.s32 24576, 24576
      %27 = vsyncadd [#allocation6], %s26
      %s28 = sshll.u32 [#allocation5], 4
      %s29 = int_to_ptr.vmem [resolvable:$true] %s28
      %34 = dma.hbm_to_vmem [thread:$0]  %s1, 24576, %s29, [#allocation6], 256, 256, 16
    $region9: #{embedding_network_forward.1} parent=1 // pred_fallthru
      _
    // Predicated region
    $region10: #{embedding_network_forward.1} parent=1 // pred_check
      _
    $region11: #{embedding_network_forward.1} parent=1 // pred_check_branch
      %36 = sbr.rel (0) target = $region13
    $region12: #{embedding_network_forward.1} parent=1 // pred_region
      _
    $region13: #{embedding_network_forward.1} parent=1 // pred_fallthru
      _
    // Predicated region
    $region14: #{embedding_network_forward.1} parent=1 // pred_check
      _
    $region15: #{embedding_network_forward.1} parent=1 // pred_check_branch
      %38 = sbr.rel (0) target = $region17
    $region16: #{embedding_network_forward.1} parent=1 // pred_region
      %s40 = ssub.s32 8192, 8192
      %41 = vsyncadd [#allocation6], %s40
      %s42 = sshll.u32 [#allocation7], 4
      %s43 = int_to_ptr.vmem [resolvable:$true] %s42
      %48 = dma.hbm_to_vmem [thread:$0]  %s3, 8192, %s43, [#allocation6], 128, 128, 8
    $region17: #{embedding_network_forward.1} parent=1 // pred_fallthru
      _
    // Predicated region
    $region18: #{embedding_network_forward.1} parent=1 // pred_check
      _
    $region19: #{embedding_network_forward.1} parent=1 // pred_check_branch
      %50 = sbr.rel (0) target = $region21
    $region20: #{embedding_network_forward.1} parent=1 // pred_region
      _
    $region21: #{embedding_network_forward.1} parent=1 // pred_fallthru
      _
    // Predicated region
    $region22: #{embedding_network_forward.1} parent=1 // pred_check
      _
    $region23: #{embedding_network_forward.1} parent=1 // pred_check_branch
      %52 = sbr.rel (0) target = $region25
    $region24: #{embedding_network_forward.1} parent=1 // pred_region
      %53 = dma.done [#allocation3], 768
    $region25: #{embedding_network_forward.1} parent=1 // pred_fallthru
      _
    // Predicated region
    $region26: #{embedding_network_forward.1} parent=1 // pred_check
      _
    $region27: #{embedding_network_forward.1} parent=1 // pred_check_branch
      %55 = sbr.rel (0) target = $region29
    $region28: #{embedding_network_forward.1} parent=1 // pred_region
      %56 = dma.done [#allocation6], 24576
    $region29: #{embedding_network_forward.1} parent=1 // pred_fallthru
      _
    // Predicated region
    $region30: #{embedding_network_forward.1} parent=1 // pred_check
      _
    $region31: #{embedding_network_forward.1} parent=1 // pred_check_branch
      %58 = sbr.rel (0) target = $region33
    $region32: #{embedding_network_forward.1} parent=1 // pred_region
      %59 = dma.done [#allocation6], 8192
    $region33: #{embedding_network_forward.1} parent=1 // pred_fallthru
      _
    %v60 = vld [vmem:[#allocation2] sm:$0xff]
    %v61 = vld [vmem:[#allocation2 + $0x8] sm:$0xff]
    %v62 = vld [vmem:[#allocation2 + $0x10] sm:$0xff]
    %v63 = vld [vmem:[#allocation2 + $0x18] sm:$0xff]
    %v64 = vld [vmem:[#allocation2 + $0x20] sm:$0xff]
    %v65 = vld [vmem:[#allocation2 + $0x28] sm:$0xff]
    %v66 = vpack.c.bf16 %v60, %v60
    %v67 = vpack.c.bf16 %v61, %v61
    %v68 = vpack.c.bf16 %v62, %v62
    %v69 = vpack.c.bf16 %v63, %v63
    %v70 = vpack.c.bf16 %v64, %v64
    %v71 = vpack.c.bf16 %v65, %v65
    %v72 = vld [vmem:[#allocation5] sm:$0xff]
    %v73 = vld [vmem:[#allocation5 + $0x8] sm:$0xff]
    %v74 = vld [vmem:[#allocation5 + $0x10] sm:$0xff]
    %v75 = vld [vmem:[#allocation5 + $0x18] sm:$0xff]
    %v76 = vld [vmem:[#allocation5 + $0x20] sm:$0xff]
    %v77 = vld [vmem:[#allocation5 + $0x28] sm:$0xff]
    %v78 = vld [vmem:[#allocation5 + $0x30] sm:$0xff]
    %v79 = vld [vmem:[#allocation5 + $0x38] sm:$0xff]
    %v80 = vld [vmem:[#allocation5 + $0x40] sm:$0xff]
    %v81 = vld [vmem:[#allocation5 + $0x48] sm:$0xff]
    %v82 = vld [vmem:[#allocation5 + $0x50] sm:$0xff]
    %v83 = vld [vmem:[#allocation5 + $0x58] sm:$0xff]
    %v84 = vld [vmem:[#allocation5 + $0x60] sm:$0xff]
    %v85 = vld [vmem:[#allocation5 + $0x68] sm:$0xff]
    %v86 = vld [vmem:[#allocation5 + $0x70] sm:$0xff]
    %v87 = vld [vmem:[#allocation5 + $0x78] sm:$0xff]
    %v88 = vld [vmem:[#allocation5 + $0x80] sm:$0xff]
    %v89 = vld [vmem:[#allocation5 + $0x88] sm:$0xff]
    %v90 = vld [vmem:[#allocation5 + $0x90] sm:$0xff]
    %v91 = vld [vmem:[#allocation5 + $0x98] sm:$0xff]
    %v92 = vld [vmem:[#allocation5 + $0xa0] sm:$0xff]
    %v93 = vld [vmem:[#allocation5 + $0xa8] sm:$0xff]
    %v94 = vld [vmem:[#allocation5 + $0xb0] sm:$0xff]
    %v95 = vld [vmem:[#allocation5 + $0xb8] sm:$0xff]
    %v96 = vld [vmem:[#allocation5 + $0xc0] sm:$0xff]
    %v97 = vld [vmem:[#allocation5 + $0xc8] sm:$0xff]
    %v98 = vld [vmem:[#allocation5 + $0xd0] sm:$0xff]
    %v99 = vld [vmem:[#allocation5 + $0xd8] sm:$0xff]
    %v100 = vld [vmem:[#allocation5 + $0xe0] sm:$0xff]
    %v101 = vld [vmem:[#allocation5 + $0xe8] sm:$0xff]
    %v102 = vld [vmem:[#allocation5 + $0xf0] sm:$0xff]
    %v103 = vld [vmem:[#allocation5 + $0xf8] sm:$0xff]
    %v104 = vld [vmem:[#allocation5 + $0x100] sm:$0xff]
    %v105 = vld [vmem:[#allocation5 + $0x108] sm:$0xff]
    %v106 = vld [vmem:[#allocation5 + $0x110] sm:$0xff]
    %v107 = vld [vmem:[#allocation5 + $0x118] sm:$0xff]
    %v108 = vld [vmem:[#allocation5 + $0x120] sm:$0xff]
    %v109 = vld [vmem:[#allocation5 + $0x128] sm:$0xff]
    %v110 = vld [vmem:[#allocation5 + $0x130] sm:$0xff]
    %v111 = vld [vmem:[#allocation5 + $0x138] sm:$0xff]
    %v112 = vld [vmem:[#allocation5 + $0x140] sm:$0xff]
    %v113 = vld [vmem:[#allocation5 + $0x148] sm:$0xff]
    %v114 = vld [vmem:[#allocation5 + $0x150] sm:$0xff]
    %v115 = vld [vmem:[#allocation5 + $0x158] sm:$0xff]
    %v116 = vld [vmem:[#allocation5 + $0x160] sm:$0xff]
    %v117 = vld [vmem:[#allocation5 + $0x168] sm:$0xff]
    %v118 = vld [vmem:[#allocation5 + $0x170] sm:$0xff]
    %v119 = vld [vmem:[#allocation5 + $0x178] sm:$0xff]
    %v120 = vld [vmem:[#allocation5 + $0x180] sm:$0xff]
    %v121 = vld [vmem:[#allocation5 + $0x188] sm:$0xff]
    %v122 = vld [vmem:[#allocation5 + $0x190] sm:$0xff]
    %v123 = vld [vmem:[#allocation5 + $0x198] sm:$0xff]
    %v124 = vld [vmem:[#allocation5 + $0x1a0] sm:$0xff]
    %v125 = vld [vmem:[#allocation5 + $0x1a8] sm:$0xff]
    %v126 = vld [vmem:[#allocation5 + $0x1b0] sm:$0xff]
    %v127 = vld [vmem:[#allocation5 + $0x1b8] sm:$0xff]
    %v128 = vld [vmem:[#allocation5 + $0x1c0] sm:$0xff]
    %v129 = vld [vmem:[#allocation5 + $0x1c8] sm:$0xff]
    %v130 = vld [vmem:[#allocation5 + $0x1d0] sm:$0xff]
    %v131 = vld [vmem:[#allocation5 + $0x1d8] sm:$0xff]
    %v132 = vld [vmem:[#allocation5 + $0x1e0] sm:$0xff]
    %v133 = vld [vmem:[#allocation5 + $0x1e8] sm:$0xff]
    %v134 = vld [vmem:[#allocation5 + $0x1f0] sm:$0xff]
    %v135 = vld [vmem:[#allocation5 + $0x1f8] sm:$0xff]
    %v136 = vld [vmem:[#allocation5 + $0x200] sm:$0xff]
    %v137 = vld [vmem:[#allocation5 + $0x208] sm:$0xff]
    %v138 = vld [vmem:[#allocation5 + $0x210] sm:$0xff]
    %v139 = vld [vmem:[#allocation5 + $0x218] sm:$0xff]
    %v140 = vld [vmem:[#allocation5 + $0x220] sm:$0xff]
    %v141 = vld [vmem:[#allocation5 + $0x228] sm:$0xff]
    %v142 = vld [vmem:[#allocation5 + $0x230] sm:$0xff]
    %v143 = vld [vmem:[#allocation5 + $0x238] sm:$0xff]
    %v144 = vld [vmem:[#allocation5 + $0x240] sm:$0xff]
    %v145 = vld [vmem:[#allocation5 + $0x248] sm:$0xff]
    %v146 = vld [vmem:[#allocation5 + $0x250] sm:$0xff]
    %v147 = vld [vmem:[#allocation5 + $0x258] sm:$0xff]
    %v148 = vld [vmem:[#allocation5 + $0x260] sm:$0xff]
    %v149 = vld [vmem:[#allocation5 + $0x268] sm:$0xff]
    %v150 = vld [vmem:[#allocation5 + $0x270] sm:$0xff]
    %v151 = vld [vmem:[#allocation5 + $0x278] sm:$0xff]
    %v152 = vld [vmem:[#allocation5 + $0x280] sm:$0xff]
    %v153 = vld [vmem:[#allocation5 + $0x288] sm:$0xff]
    %v154 = vld [vmem:[#allocation5 + $0x290] sm:$0xff]
    %v155 = vld [vmem:[#allocation5 + $0x298] sm:$0xff]
    %v156 = vld [vmem:[#allocation5 + $0x2a0] sm:$0xff]
    %v157 = vld [vmem:[#allocation5 + $0x2a8] sm:$0xff]
    %v158 = vld [vmem:[#allocation5 + $0x2b0] sm:$0xff]
    %v159 = vld [vmem:[#allocation5 + $0x2b8] sm:$0xff]
    %v160 = vld [vmem:[#allocation5 + $0x2c0] sm:$0xff]
    %v161 = vld [vmem:[#allocation5 + $0x2c8] sm:$0xff]
    %v162 = vld [vmem:[#allocation5 + $0x2d0] sm:$0xff]
    %v163 = vld [vmem:[#allocation5 + $0x2d8] sm:$0xff]
    %v164 = vld [vmem:[#allocation5 + $0x2e0] sm:$0xff]
    %v165 = vld [vmem:[#allocation5 + $0x2e8] sm:$0xff]
    %v166 = vld [vmem:[#allocation5 + $0x2f0] sm:$0xff]
    %v167 = vld [vmem:[#allocation5 + $0x2f8] sm:$0xff]
    %v168 = vld [vmem:[#allocation5 + $0x300] sm:$0xff]
    %v169 = vld [vmem:[#allocation5 + $0x308] sm:$0xff]
    %v170 = vld [vmem:[#allocation5 + $0x310] sm:$0xff]
    %v171 = vld [vmem:[#allocation5 + $0x318] sm:$0xff]
    %v172 = vld [vmem:[#allocation5 + $0x320] sm:$0xff]
    %v173 = vld [vmem:[#allocation5 + $0x328] sm:$0xff]
    %v174 = vld [vmem:[#allocation5 + $0x330] sm:$0xff]
    %v175 = vld [vmem:[#allocation5 + $0x338] sm:$0xff]
    %v176 = vld [vmem:[#allocation5 + $0x340] sm:$0xff]
    %v177 = vld [vmem:[#allocation5 + $0x348] sm:$0xff]
    %v178 = vld [vmem:[#allocation5 + $0x350] sm:$0xff]
    %v179 = vld [vmem:[#allocation5 + $0x358] sm:$0xff]
    %v180 = vld [vmem:[#allocation5 + $0x360] sm:$0xff]
    %v181 = vld [vmem:[#allocation5 + $0x368] sm:$0xff]
    %v182 = vld [vmem:[#allocation5 + $0x370] sm:$0xff]
    %v183 = vld [vmem:[#allocation5 + $0x378] sm:$0xff]
    %v184 = vld [vmem:[#allocation5 + $0x380] sm:$0xff]
    %v185 = vld [vmem:[#allocation5 + $0x388] sm:$0xff]
    %v186 = vld [vmem:[#allocation5 + $0x390] sm:$0xff]
    %v187 = vld [vmem:[#allocation5 + $0x398] sm:$0xff]
    %v188 = vld [vmem:[#allocation5 + $0x3a0] sm:$0xff]
    %v189 = vld [vmem:[#allocation5 + $0x3a8] sm:$0xff]
    %v190 = vld [vmem:[#allocation5 + $0x3b0] sm:$0xff]
    %v191 = vld [vmem:[#allocation5 + $0x3b8] sm:$0xff]
    %v192 = vld [vmem:[#allocation5 + $0x3c0] sm:$0xff]
    %v193 = vld [vmem:[#allocation5 + $0x3c8] sm:$0xff]
    %v194 = vld [vmem:[#allocation5 + $0x3d0] sm:$0xff]
    %v195 = vld [vmem:[#allocation5 + $0x3d8] sm:$0xff]
    %v196 = vld [vmem:[#allocation5 + $0x3e0] sm:$0xff]
    %v197 = vld [vmem:[#allocation5 + $0x3e8] sm:$0xff]
    %v198 = vld [vmem:[#allocation5 + $0x3f0] sm:$0xff]
    %v199 = vld [vmem:[#allocation5 + $0x3f8] sm:$0xff]
    %v200 = vld [vmem:[#allocation5 + $0x400] sm:$0xff]
    %v201 = vld [vmem:[#allocation5 + $0x408] sm:$0xff]
    %v202 = vld [vmem:[#allocation5 + $0x410] sm:$0xff]
    %v203 = vld [vmem:[#allocation5 + $0x418] sm:$0xff]
    %v204 = vld [vmem:[#allocation5 + $0x420] sm:$0xff]
    %v205 = vld [vmem:[#allocation5 + $0x428] sm:$0xff]
    %v206 = vld [vmem:[#allocation5 + $0x430] sm:$0xff]
    %v207 = vld [vmem:[#allocation5 + $0x438] sm:$0xff]
    %v208 = vld [vmem:[#allocation5 + $0x440] sm:$0xff]
    %v209 = vld [vmem:[#allocation5 + $0x448] sm:$0xff]
    %v210 = vld [vmem:[#allocation5 + $0x450] sm:$0xff]
    %v211 = vld [vmem:[#allocation5 + $0x458] sm:$0xff]
    %v212 = vld [vmem:[#allocation5 + $0x460] sm:$0xff]
    %v213 = vld [vmem:[#allocation5 + $0x468] sm:$0xff]
    %v214 = vld [vmem:[#allocation5 + $0x470] sm:$0xff]
    %v215 = vld [vmem:[#allocation5 + $0x478] sm:$0xff]
    %v216 = vld [vmem:[#allocation5 + $0x480] sm:$0xff]
    %v217 = vld [vmem:[#allocation5 + $0x488] sm:$0xff]
    %v218 = vld [vmem:[#allocation5 + $0x490] sm:$0xff]
    %v219 = vld [vmem:[#allocation5 + $0x498] sm:$0xff]
    %v220 = vld [vmem:[#allocation5 + $0x4a0] sm:$0xff]
    %v221 = vld [vmem:[#allocation5 + $0x4a8] sm:$0xff]
    %v222 = vld [vmem:[#allocation5 + $0x4b0] sm:$0xff]
    %v223 = vld [vmem:[#allocation5 + $0x4b8] sm:$0xff]
    %v224 = vld [vmem:[#allocation5 + $0x4c0] sm:$0xff]
    %v225 = vld [vmem:[#allocation5 + $0x4c8] sm:$0xff]
    %v226 = vld [vmem:[#allocation5 + $0x4d0] sm:$0xff]
    %v227 = vld [vmem:[#allocation5 + $0x4d8] sm:$0xff]
    %v228 = vld [vmem:[#allocation5 + $0x4e0] sm:$0xff]
    %v229 = vld [vmem:[#allocation5 + $0x4e8] sm:$0xff]
    %v230 = vld [vmem:[#allocation5 + $0x4f0] sm:$0xff]
    %v231 = vld [vmem:[#allocation5 + $0x4f8] sm:$0xff]
    %v232 = vld [vmem:[#allocation5 + $0x500] sm:$0xff]
    %v233 = vld [vmem:[#allocation5 + $0x508] sm:$0xff]
    %v234 = vld [vmem:[#allocation5 + $0x510] sm:$0xff]
    %v235 = vld [vmem:[#allocation5 + $0x518] sm:$0xff]
    %v236 = vld [vmem:[#allocation5 + $0x520] sm:$0xff]
    %v237 = vld [vmem:[#allocation5 + $0x528] sm:$0xff]
    %v238 = vld [vmem:[#allocation5 + $0x530] sm:$0xff]
    %v239 = vld [vmem:[#allocation5 + $0x538] sm:$0xff]
    %v240 = vld [vmem:[#allocation5 + $0x540] sm:$0xff]
    %v241 = vld [vmem:[#allocation5 + $0x548] sm:$0xff]
    %v242 = vld [vmem:[#allocation5 + $0x550] sm:$0xff]
    %v243 = vld [vmem:[#allocation5 + $0x558] sm:$0xff]
    %v244 = vld [vmem:[#allocation5 + $0x560] sm:$0xff]
    %v245 = vld [vmem:[#allocation5 + $0x568] sm:$0xff]
    %v246 = vld [vmem:[#allocation5 + $0x570] sm:$0xff]
    %v247 = vld [vmem:[#allocation5 + $0x578] sm:$0xff]
    %v248 = vld [vmem:[#allocation5 + $0x580] sm:$0xff]
    %v249 = vld [vmem:[#allocation5 + $0x588] sm:$0xff]
    %v250 = vld [vmem:[#allocation5 + $0x590] sm:$0xff]
    %v251 = vld [vmem:[#allocation5 + $0x598] sm:$0xff]
    %v252 = vld [vmem:[#allocation5 + $0x5a0] sm:$0xff]
    %v253 = vld [vmem:[#allocation5 + $0x5a8] sm:$0xff]
    %v254 = vld [vmem:[#allocation5 + $0x5b0] sm:$0xff]
    %v255 = vld [vmem:[#allocation5 + $0x5b8] sm:$0xff]
    %v256 = vld [vmem:[#allocation5 + $0x5c0] sm:$0xff]
    %v257 = vld [vmem:[#allocation5 + $0x5c8] sm:$0xff]
    %v258 = vld [vmem:[#allocation5 + $0x5d0] sm:$0xff]
    %v259 = vld [vmem:[#allocation5 + $0x5d8] sm:$0xff]
    %v260 = vld [vmem:[#allocation5 + $0x5e0] sm:$0xff]
    %v261 = vld [vmem:[#allocation5 + $0x5e8] sm:$0xff]
    %v262 = vld [vmem:[#allocation5 + $0x5f0] sm:$0xff]
    %v263 = vld [vmem:[#allocation5 + $0x5f8] sm:$0xff]
    %v264 = vld [vmem:[%s2] sm:$0xf]
    %v266 = vlaneseq
    %v267 = vshrl.u32 %v266, 7
    %v268 = vsub.s32 0, %v267
    %v269 = vrot.slane %v264, %v268
    %v270 = vlaneseq
    %v271 = vshrl.u32 %v270, 7
    %v272 = vsub.s32 1, %v271
    %v273 = vrot.slane %v264, %v272
    %v274 = vlaneseq
    %v275 = vshrl.u32 %v274, 7
    %v276 = vsub.s32 2, %v275
    %v277 = vrot.slane %v264, %v276
    %v278 = vlaneseq
    %v279 = vshrl.u32 %v278, 7
    %v280 = vsub.s32 3, %v279
    %v281 = vrot.slane %v264, %v280
    %v478 = vunpack.c.l.b16 %v72
    %v479 = vunpack.c.h.b16 %v72
    %v480 = vunpack.c.l.b16 %v73
    %v481 = vunpack.c.h.b16 %v73
    %v482 = vunpack.c.l.b16 %v74
    %v483 = vunpack.c.h.b16 %v74
    %v484 = vunpack.c.l.b16 %v75
    %v485 = vunpack.c.h.b16 %v75
    %v486 = vunpack.c.l.b16 %v76
    %v487 = vunpack.c.h.b16 %v76
    %v488 = vunpack.c.l.b16 %v77
    %v489 = vunpack.c.h.b16 %v77
    %v490 = vunpack.c.l.b16 %v78
    %v491 = vunpack.c.h.b16 %v78
    %v492 = vunpack.c.l.b16 %v79
    %v493 = vunpack.c.h.b16 %v79
    %v494 = vunpack.c.l.b16 %v80
    %v495 = vunpack.c.h.b16 %v80
    %v496 = vunpack.c.l.b16 %v81
    %v497 = vunpack.c.h.b16 %v81
    %v498 = vunpack.c.l.b16 %v82
    %v499 = vunpack.c.h.b16 %v82
    %v500 = vunpack.c.l.b16 %v83
    %v501 = vunpack.c.h.b16 %v83
    %v502 = vunpack.c.l.b16 %v84
    %v503 = vunpack.c.h.b16 %v84
    %v504 = vunpack.c.l.b16 %v85
    %v505 = vunpack.c.h.b16 %v85
    %v506 = vunpack.c.l.b16 %v86
    %v507 = vunpack.c.h.b16 %v86
    %v508 = vunpack.c.l.b16 %v87
    %v509 = vunpack.c.h.b16 %v87
    %v510 = vunpack.c.l.b16 %v88
    %v511 = vunpack.c.h.b16 %v88
    %v512 = vunpack.c.l.b16 %v89
    %v513 = vunpack.c.h.b16 %v89
    %v514 = vunpack.c.l.b16 %v90
    %v515 = vunpack.c.h.b16 %v90
    %v516 = vunpack.c.l.b16 %v91
    %v517 = vunpack.c.h.b16 %v91
    %v518 = vunpack.c.l.b16 %v92
    %v519 = vunpack.c.h.b16 %v92
    %v520 = vunpack.c.l.b16 %v93
    %v521 = vunpack.c.h.b16 %v93
    %v522 = vunpack.c.l.b16 %v94
    %v523 = vunpack.c.h.b16 %v94
    %v524 = vunpack.c.l.b16 %v95
    %v525 = vunpack.c.h.b16 %v95
    %v526 = vunpack.c.l.b16 %v96
    %v527 = vunpack.c.h.b16 %v96
    %v528 = vunpack.c.l.b16 %v97
    %v529 = vunpack.c.h.b16 %v97
    %v530 = vunpack.c.l.b16 %v98
    %v531 = vunpack.c.h.b16 %v98
    %v532 = vunpack.c.l.b16 %v99
    %v533 = vunpack.c.h.b16 %v99
    %v534 = vunpack.c.l.b16 %v100
    %v535 = vunpack.c.h.b16 %v100
    %v536 = vunpack.c.l.b16 %v101
    %v537 = vunpack.c.h.b16 %v101
    %v538 = vunpack.c.l.b16 %v102
    %v539 = vunpack.c.h.b16 %v102
    %v540 = vunpack.c.l.b16 %v103
    %v541 = vunpack.c.h.b16 %v103
    %v542 = vunpack.c.l.b16 %v104
    %v543 = vunpack.c.h.b16 %v104
    %v544 = vunpack.c.l.b16 %v105
    %v545 = vunpack.c.h.b16 %v105
    %v546 = vunpack.c.l.b16 %v106
    %v547 = vunpack.c.h.b16 %v106
    %v548 = vunpack.c.l.b16 %v107
    %v549 = vunpack.c.h.b16 %v107
    %v550 = vunpack.c.l.b16 %v108
    %v551 = vunpack.c.h.b16 %v108
    %v552 = vunpack.c.l.b16 %v109
    %v553 = vunpack.c.h.b16 %v109
    %v554 = vunpack.c.l.b16 %v110
    %v555 = vunpack.c.h.b16 %v110
    %v556 = vunpack.c.l.b16 %v111
    %v557 = vunpack.c.h.b16 %v111
    %v558 = vunpack.c.l.b16 %v112
    %v559 = vunpack.c.h.b16 %v112
    %v560 = vunpack.c.l.b16 %v113
    %v561 = vunpack.c.h.b16 %v113
    %v562 = vunpack.c.l.b16 %v114
    %v563 = vunpack.c.h.b16 %v114
    %v564 = vunpack.c.l.b16 %v115
    %v565 = vunpack.c.h.b16 %v115
    %v566 = vunpack.c.l.b16 %v116
    %v567 = vunpack.c.h.b16 %v116
    %v568 = vunpack.c.l.b16 %v117
    %v569 = vunpack.c.h.b16 %v117
    %v570 = vunpack.c.l.b16 %v118
    %v571 = vunpack.c.h.b16 %v118
    %v572 = vunpack.c.l.b16 %v119
    %v573 = vunpack.c.h.b16 %v119
    %v574 = vunpack.c.l.b16 %v120
    %v575 = vunpack.c.h.b16 %v120
    %v576 = vunpack.c.l.b16 %v121
    %v577 = vunpack.c.h.b16 %v121
    %v578 = vunpack.c.l.b16 %v122
    %v579 = vunpack.c.h.b16 %v122
    %v580 = vunpack.c.l.b16 %v123
    %v581 = vunpack.c.h.b16 %v123
    %v582 = vunpack.c.l.b16 %v124
    %v583 = vunpack.c.h.b16 %v124
    %v584 = vunpack.c.l.b16 %v125
    %v585 = vunpack.c.h.b16 %v125
    %v586 = vunpack.c.l.b16 %v126
    %v587 = vunpack.c.h.b16 %v126
    %v588 = vunpack.c.l.b16 %v127
    %v589 = vunpack.c.h.b16 %v127
    %v590 = vunpack.c.l.b16 %v128
    %v591 = vunpack.c.h.b16 %v128
    %v592 = vunpack.c.l.b16 %v129
    %v593 = vunpack.c.h.b16 %v129
    %v594 = vunpack.c.l.b16 %v130
    %v595 = vunpack.c.h.b16 %v130
    %v596 = vunpack.c.l.b16 %v131
    %v597 = vunpack.c.h.b16 %v131
    %v598 = vunpack.c.l.b16 %v132
    %v599 = vunpack.c.h.b16 %v132
    %v600 = vunpack.c.l.b16 %v133
    %v601 = vunpack.c.h.b16 %v133
    %v602 = vunpack.c.l.b16 %v134
    %v603 = vunpack.c.h.b16 %v134
    %v604 = vunpack.c.l.b16 %v135
    %v605 = vunpack.c.h.b16 %v135
    %v606 = vunpack.c.l.b16 %v136
    %v607 = vunpack.c.h.b16 %v136
    %v608 = vunpack.c.l.b16 %v137
    %v609 = vunpack.c.h.b16 %v137
    %v610 = vunpack.c.l.b16 %v138
    %v611 = vunpack.c.h.b16 %v138
    %v612 = vunpack.c.l.b16 %v139
    %v613 = vunpack.c.h.b16 %v139
    %v614 = vunpack.c.l.b16 %v140
    %v615 = vunpack.c.h.b16 %v140
    %v616 = vunpack.c.l.b16 %v141
    %v617 = vunpack.c.h.b16 %v141
    %v618 = vunpack.c.l.b16 %v142
    %v619 = vunpack.c.h.b16 %v142
    %v620 = vunpack.c.l.b16 %v143
    %v621 = vunpack.c.h.b16 %v143
    %v622 = vunpack.c.l.b16 %v144
    %v623 = vunpack.c.h.b16 %v144
    %v624 = vunpack.c.l.b16 %v145
    %v625 = vunpack.c.h.b16 %v145
    %v626 = vunpack.c.l.b16 %v146
    %v627 = vunpack.c.h.b16 %v146
    %v628 = vunpack.c.l.b16 %v147
    %v629 = vunpack.c.h.b16 %v147
    %v630 = vunpack.c.l.b16 %v148
    %v631 = vunpack.c.h.b16 %v148
    %v632 = vunpack.c.l.b16 %v149
    %v633 = vunpack.c.h.b16 %v149
    %v634 = vunpack.c.l.b16 %v150
    %v635 = vunpack.c.h.b16 %v150
    %v636 = vunpack.c.l.b16 %v151
    %v637 = vunpack.c.h.b16 %v151
    %v638 = vunpack.c.l.b16 %v152
    %v639 = vunpack.c.h.b16 %v152
    %v640 = vunpack.c.l.b16 %v153
    %v641 = vunpack.c.h.b16 %v153
    %v642 = vunpack.c.l.b16 %v154
    %v643 = vunpack.c.h.b16 %v154
    %v644 = vunpack.c.l.b16 %v155
    %v645 = vunpack.c.h.b16 %v155
    %v646 = vunpack.c.l.b16 %v156
    %v647 = vunpack.c.h.b16 %v156
    %v648 = vunpack.c.l.b16 %v157
    %v649 = vunpack.c.h.b16 %v157
    %v650 = vunpack.c.l.b16 %v158
    %v651 = vunpack.c.h.b16 %v158
    %v652 = vunpack.c.l.b16 %v159
    %v653 = vunpack.c.h.b16 %v159
    %v654 = vunpack.c.l.b16 %v160
    %v655 = vunpack.c.h.b16 %v160
    %v656 = vunpack.c.l.b16 %v161
    %v657 = vunpack.c.h.b16 %v161
    %v658 = vunpack.c.l.b16 %v162
    %v659 = vunpack.c.h.b16 %v162
    %v660 = vunpack.c.l.b16 %v163
    %v661 = vunpack.c.h.b16 %v163
    %v662 = vunpack.c.l.b16 %v164
    %v663 = vunpack.c.h.b16 %v164
    %v664 = vunpack.c.l.b16 %v165
    %v665 = vunpack.c.h.b16 %v165
    %v666 = vunpack.c.l.b16 %v166
    %v667 = vunpack.c.h.b16 %v166
    %v668 = vunpack.c.l.b16 %v167
    %v669 = vunpack.c.h.b16 %v167
    %v670 = vunpack.c.l.b16 %v168
    %v671 = vunpack.c.h.b16 %v168
    %v672 = vunpack.c.l.b16 %v169
    %v673 = vunpack.c.h.b16 %v169
    %v674 = vunpack.c.l.b16 %v170
    %v675 = vunpack.c.h.b16 %v170
    %v676 = vunpack.c.l.b16 %v171
    %v677 = vunpack.c.h.b16 %v171
    %v678 = vunpack.c.l.b16 %v172
    %v679 = vunpack.c.h.b16 %v172
    %v680 = vunpack.c.l.b16 %v173
    %v681 = vunpack.c.h.b16 %v173
    %v682 = vunpack.c.l.b16 %v174
    %v683 = vunpack.c.h.b16 %v174
    %v684 = vunpack.c.l.b16 %v175
    %v685 = vunpack.c.h.b16 %v175
    %v686 = vunpack.c.l.b16 %v176
    %v687 = vunpack.c.h.b16 %v176
    %v688 = vunpack.c.l.b16 %v177
    %v689 = vunpack.c.h.b16 %v177
    %v690 = vunpack.c.l.b16 %v178
    %v691 = vunpack.c.h.b16 %v178
    %v692 = vunpack.c.l.b16 %v179
    %v693 = vunpack.c.h.b16 %v179
    %v694 = vunpack.c.l.b16 %v180
    %v695 = vunpack.c.h.b16 %v180
    %v696 = vunpack.c.l.b16 %v181
    %v697 = vunpack.c.h.b16 %v181
    %v698 = vunpack.c.l.b16 %v182
    %v699 = vunpack.c.h.b16 %v182
    %v700 = vunpack.c.l.b16 %v183
    %v701 = vunpack.c.h.b16 %v183
    %v702 = vunpack.c.l.b16 %v184
    %v703 = vunpack.c.h.b16 %v184
    %v704 = vunpack.c.l.b16 %v185
    %v705 = vunpack.c.h.b16 %v185
    %v706 = vunpack.c.l.b16 %v186
    %v707 = vunpack.c.h.b16 %v186
    %v708 = vunpack.c.l.b16 %v187
    %v709 = vunpack.c.h.b16 %v187
    %v710 = vunpack.c.l.b16 %v188
    %v711 = vunpack.c.h.b16 %v188
    %v712 = vunpack.c.l.b16 %v189
    %v713 = vunpack.c.h.b16 %v189
    %v714 = vunpack.c.l.b16 %v190
    %v715 = vunpack.c.h.b16 %v190
    %v716 = vunpack.c.l.b16 %v191
    %v717 = vunpack.c.h.b16 %v191
    %v718 = vunpack.c.l.b16 %v192
    %v719 = vunpack.c.h.b16 %v192
    %v720 = vunpack.c.l.b16 %v193
    %v721 = vunpack.c.h.b16 %v193
    %v722 = vunpack.c.l.b16 %v194
    %v723 = vunpack.c.h.b16 %v194
    %v724 = vunpack.c.l.b16 %v195
    %v725 = vunpack.c.h.b16 %v195
    %v726 = vunpack.c.l.b16 %v196
    %v727 = vunpack.c.h.b16 %v196
    %v728 = vunpack.c.l.b16 %v197
    %v729 = vunpack.c.h.b16 %v197
    %v730 = vunpack.c.l.b16 %v198
    %v731 = vunpack.c.h.b16 %v198
    %v732 = vunpack.c.l.b16 %v199
    %v733 = vunpack.c.h.b16 %v199
    %v734 = vunpack.c.l.b16 %v200
    %v735 = vunpack.c.h.b16 %v200
    %v736 = vunpack.c.l.b16 %v201
    %v737 = vunpack.c.h.b16 %v201
    %v738 = vunpack.c.l.b16 %v202
    %v739 = vunpack.c.h.b16 %v202
    %v740 = vunpack.c.l.b16 %v203
    %v741 = vunpack.c.h.b16 %v203
    %v742 = vunpack.c.l.b16 %v204
    %v743 = vunpack.c.h.b16 %v204
    %v744 = vunpack.c.l.b16 %v205
    %v745 = vunpack.c.h.b16 %v205
    %v746 = vunpack.c.l.b16 %v206
    %v747 = vunpack.c.h.b16 %v206
    %v748 = vunpack.c.l.b16 %v207
    %v749 = vunpack.c.h.b16 %v207
    %v750 = vunpack.c.l.b16 %v208
    %v751 = vunpack.c.h.b16 %v208
    %v752 = vunpack.c.l.b16 %v209
    %v753 = vunpack.c.h.b16 %v209
    %v754 = vunpack.c.l.b16 %v210
    %v755 = vunpack.c.h.b16 %v210
    %v756 = vunpack.c.l.b16 %v211
    %v757 = vunpack.c.h.b16 %v211
    %v758 = vunpack.c.l.b16 %v212
    %v759 = vunpack.c.h.b16 %v212
    %v760 = vunpack.c.l.b16 %v213
    %v761 = vunpack.c.h.b16 %v213
    %v762 = vunpack.c.l.b16 %v214
    %v763 = vunpack.c.h.b16 %v214
    %v764 = vunpack.c.l.b16 %v215
    %v765 = vunpack.c.h.b16 %v215
    %v766 = vunpack.c.l.b16 %v216
    %v767 = vunpack.c.h.b16 %v216
    %v768 = vunpack.c.l.b16 %v217
    %v769 = vunpack.c.h.b16 %v217
    %v770 = vunpack.c.l.b16 %v218
    %v771 = vunpack.c.h.b16 %v218
    %v772 = vunpack.c.l.b16 %v219
    %v773 = vunpack.c.h.b16 %v219
    %v774 = vunpack.c.l.b16 %v220
    %v775 = vunpack.c.h.b16 %v220
    %v776 = vunpack.c.l.b16 %v221
    %v777 = vunpack.c.h.b16 %v221
    %v778 = vunpack.c.l.b16 %v222
    %v779 = vunpack.c.h.b16 %v222
    %v780 = vunpack.c.l.b16 %v223
    %v781 = vunpack.c.h.b16 %v223
    %v782 = vunpack.c.l.b16 %v224
    %v783 = vunpack.c.h.b16 %v224
    %v784 = vunpack.c.l.b16 %v225
    %v785 = vunpack.c.h.b16 %v225
    %v786 = vunpack.c.l.b16 %v226
    %v787 = vunpack.c.h.b16 %v226
    %v788 = vunpack.c.l.b16 %v227
    %v789 = vunpack.c.h.b16 %v227
    %v790 = vunpack.c.l.b16 %v228
    %v791 = vunpack.c.h.b16 %v228
    %v792 = vunpack.c.l.b16 %v229
    %v793 = vunpack.c.h.b16 %v229
    %v794 = vunpack.c.l.b16 %v230
    %v795 = vunpack.c.h.b16 %v230
    %v796 = vunpack.c.l.b16 %v231
    %v797 = vunpack.c.h.b16 %v231
    %v798 = vunpack.c.l.b16 %v232
    %v799 = vunpack.c.h.b16 %v232
    %v800 = vunpack.c.l.b16 %v233
    %v801 = vunpack.c.h.b16 %v233
    %v802 = vunpack.c.l.b16 %v234
    %v803 = vunpack.c.h.b16 %v234
    %v804 = vunpack.c.l.b16 %v235
    %v805 = vunpack.c.h.b16 %v235
    %v806 = vunpack.c.l.b16 %v236
    %v807 = vunpack.c.h.b16 %v236
    %v808 = vunpack.c.l.b16 %v237
    %v809 = vunpack.c.h.b16 %v237
    %v810 = vunpack.c.l.b16 %v238
    %v811 = vunpack.c.h.b16 %v238
    %v812 = vunpack.c.l.b16 %v239
    %v813 = vunpack.c.h.b16 %v239
    %v814 = vunpack.c.l.b16 %v240
    %v815 = vunpack.c.h.b16 %v240
    %v816 = vunpack.c.l.b16 %v241
    %v817 = vunpack.c.h.b16 %v241
    %v818 = vunpack.c.l.b16 %v242
    %v819 = vunpack.c.h.b16 %v242
    %v820 = vunpack.c.l.b16 %v243
    %v821 = vunpack.c.h.b16 %v243
    %v822 = vunpack.c.l.b16 %v244
    %v823 = vunpack.c.h.b16 %v244
    %v824 = vunpack.c.l.b16 %v245
    %v825 = vunpack.c.h.b16 %v245
    %v826 = vunpack.c.l.b16 %v246
    %v827 = vunpack.c.h.b16 %v246
    %v828 = vunpack.c.l.b16 %v247
    %v829 = vunpack.c.h.b16 %v247
    %v830 = vunpack.c.l.b16 %v248
    %v831 = vunpack.c.h.b16 %v248
    %v832 = vunpack.c.l.b16 %v249
    %v833 = vunpack.c.h.b16 %v249
    %v834 = vunpack.c.l.b16 %v250
    %v835 = vunpack.c.h.b16 %v250
    %v836 = vunpack.c.l.b16 %v251
    %v837 = vunpack.c.h.b16 %v251
    %v838 = vunpack.c.l.b16 %v252
    %v839 = vunpack.c.h.b16 %v252
    %v840 = vunpack.c.l.b16 %v253
    %v841 = vunpack.c.h.b16 %v253
    %v842 = vunpack.c.l.b16 %v254
    %v843 = vunpack.c.h.b16 %v254
    %v844 = vunpack.c.l.b16 %v255
    %v845 = vunpack.c.h.b16 %v255
    %v846 = vunpack.c.l.b16 %v256
    %v847 = vunpack.c.h.b16 %v256
    %v848 = vunpack.c.l.b16 %v257
    %v849 = vunpack.c.h.b16 %v257
    %v850 = vunpack.c.l.b16 %v258
    %v851 = vunpack.c.h.b16 %v258
    %v852 = vunpack.c.l.b16 %v259
    %v853 = vunpack.c.h.b16 %v259
    %v854 = vunpack.c.l.b16 %v260
    %v855 = vunpack.c.h.b16 %v260
    %v856 = vunpack.c.l.b16 %v261
    %v857 = vunpack.c.h.b16 %v261
    %v858 = vunpack.c.l.b16 %v262
    %v859 = vunpack.c.h.b16 %v262
    %v860 = vunpack.c.l.b16 %v263
    %v861 = vunpack.c.h.b16 %v263
    %v862 = vpack.c.b16 %v482, %v478
    %v863 = vpack.c.b16 %v483, %v479
    %v864 = vpack.c.b16 %v484, %v480
    %v865 = vpack.c.b16 %v485, %v481
    %v866 = vpack.c.b16 %v490, %v486
    %v867 = vpack.c.b16 %v491, %v487
    %v868 = vpack.c.b16 %v492, %v488
    %v869 = vpack.c.b16 %v493, %v489
    %v870 = vpack.c.b16 %v498, %v494
    %v871 = vpack.c.b16 %v499, %v495
    %v872 = vpack.c.b16 %v500, %v496
    %v873 = vpack.c.b16 %v501, %v497
    %v874 = vpack.c.b16 %v506, %v502
    %v875 = vpack.c.b16 %v507, %v503
    %v876 = vpack.c.b16 %v508, %v504
    %v877 = vpack.c.b16 %v509, %v505
    %v878 = vpack.c.b16 %v514, %v510
    %v879 = vpack.c.b16 %v515, %v511
    %v880 = vpack.c.b16 %v516, %v512
    %v881 = vpack.c.b16 %v517, %v513
    %v882 = vpack.c.b16 %v522, %v518
    %v883 = vpack.c.b16 %v523, %v519
    %v884 = vpack.c.b16 %v524, %v520
    %v885 = vpack.c.b16 %v525, %v521
    %v886 = vpack.c.b16 %v530, %v526
    %v887 = vpack.c.b16 %v531, %v527
    %v888 = vpack.c.b16 %v532, %v528
    %v889 = vpack.c.b16 %v533, %v529
    %v890 = vpack.c.b16 %v538, %v534
    %v891 = vpack.c.b16 %v539, %v535
    %v892 = vpack.c.b16 %v540, %v536
    %v893 = vpack.c.b16 %v541, %v537
    %v894 = vpack.c.b16 %v546, %v542
    %v895 = vpack.c.b16 %v547, %v543
    %v896 = vpack.c.b16 %v548, %v544
    %v897 = vpack.c.b16 %v549, %v545
    %v898 = vpack.c.b16 %v554, %v550
    %v899 = vpack.c.b16 %v555, %v551
    %v900 = vpack.c.b16 %v556, %v552
    %v901 = vpack.c.b16 %v557, %v553
    %v902 = vpack.c.b16 %v562, %v558
    %v903 = vpack.c.b16 %v563, %v559
    %v904 = vpack.c.b16 %v564, %v560
    %v905 = vpack.c.b16 %v565, %v561
    %v906 = vpack.c.b16 %v570, %v566
    %v907 = vpack.c.b16 %v571, %v567
    %v908 = vpack.c.b16 %v572, %v568
    %v909 = vpack.c.b16 %v573, %v569
    %v910 = vpack.c.b16 %v578, %v574
    %v911 = vpack.c.b16 %v579, %v575
    %v912 = vpack.c.b16 %v580, %v576
    %v913 = vpack.c.b16 %v581, %v577
    %v914 = vpack.c.b16 %v586, %v582
    %v915 = vpack.c.b16 %v587, %v583
    %v916 = vpack.c.b16 %v588, %v584
    %v917 = vpack.c.b16 %v589, %v585
    %v918 = vpack.c.b16 %v594, %v590
    %v919 = vpack.c.b16 %v595, %v591
    %v920 = vpack.c.b16 %v596, %v592
    %v921 = vpack.c.b16 %v597, %v593
    %v922 = vpack.c.b16 %v602, %v598
    %v923 = vpack.c.b16 %v603, %v599
    %v924 = vpack.c.b16 %v604, %v600
    %v925 = vpack.c.b16 %v605, %v601
    %v926 = vpack.c.b16 %v610, %v606
    %v927 = vpack.c.b16 %v611, %v607
    %v928 = vpack.c.b16 %v612, %v608
    %v929 = vpack.c.b16 %v613, %v609
    %v930 = vpack.c.b16 %v618, %v614
    %v931 = vpack.c.b16 %v619, %v615
    %v932 = vpack.c.b16 %v620, %v616
    %v933 = vpack.c.b16 %v621, %v617
    %v934 = vpack.c.b16 %v626, %v622
    %v935 = vpack.c.b16 %v627, %v623
    %v936 = vpack.c.b16 %v628, %v624
    %v937 = vpack.c.b16 %v629, %v625
    %v938 = vpack.c.b16 %v634, %v630
    %v939 = vpack.c.b16 %v635, %v631
    %v940 = vpack.c.b16 %v636, %v632
    %v941 = vpack.c.b16 %v637, %v633
    %v942 = vpack.c.b16 %v642, %v638
    %v943 = vpack.c.b16 %v643, %v639
    %v944 = vpack.c.b16 %v644, %v640
    %v945 = vpack.c.b16 %v645, %v641
    %v946 = vpack.c.b16 %v650, %v646
    %v947 = vpack.c.b16 %v651, %v647
    %v948 = vpack.c.b16 %v652, %v648
    %v949 = vpack.c.b16 %v653, %v649
    %v950 = vpack.c.b16 %v658, %v654
    %v951 = vpack.c.b16 %v659, %v655
    %v952 = vpack.c.b16 %v660, %v656
    %v953 = vpack.c.b16 %v661, %v657
    %v954 = vpack.c.b16 %v666, %v662
    %v955 = vpack.c.b16 %v667, %v663
    %v956 = vpack.c.b16 %v668, %v664
    %v957 = vpack.c.b16 %v669, %v665
    %v958 = vpack.c.b16 %v674, %v670
    %v959 = vpack.c.b16 %v675, %v671
    %v960 = vpack.c.b16 %v676, %v672
    %v961 = vpack.c.b16 %v677, %v673
    %v962 = vpack.c.b16 %v682, %v678
    %v963 = vpack.c.b16 %v683, %v679
    %v964 = vpack.c.b16 %v684, %v680
    %v965 = vpack.c.b16 %v685, %v681
    %v966 = vpack.c.b16 %v690, %v686
    %v967 = vpack.c.b16 %v691, %v687
    %v968 = vpack.c.b16 %v692, %v688
    %v969 = vpack.c.b16 %v693, %v689
    %v970 = vpack.c.b16 %v698, %v694
    %v971 = vpack.c.b16 %v699, %v695
    %v972 = vpack.c.b16 %v700, %v696
    %v973 = vpack.c.b16 %v701, %v697
    %v974 = vpack.c.b16 %v706, %v702
    %v975 = vpack.c.b16 %v707, %v703
    %v976 = vpack.c.b16 %v708, %v704
    %v977 = vpack.c.b16 %v709, %v705
    %v978 = vpack.c.b16 %v714, %v710
    %v979 = vpack.c.b16 %v715, %v711
    %v980 = vpack.c.b16 %v716, %v712
    %v981 = vpack.c.b16 %v717, %v713
    %v982 = vpack.c.b16 %v722, %v718
    %v983 = vpack.c.b16 %v723, %v719
    %v984 = vpack.c.b16 %v724, %v720
    %v985 = vpack.c.b16 %v725, %v721
    %v986 = vpack.c.b16 %v730, %v726
    %v987 = vpack.c.b16 %v731, %v727
    %v988 = vpack.c.b16 %v732, %v728
    %v989 = vpack.c.b16 %v733, %v729
    %v990 = vpack.c.b16 %v738, %v734
    %v991 = vpack.c.b16 %v739, %v735
    %v992 = vpack.c.b16 %v740, %v736
    %v993 = vpack.c.b16 %v741, %v737
    %v994 = vpack.c.b16 %v746, %v742
    %v995 = vpack.c.b16 %v747, %v743
    %v996 = vpack.c.b16 %v748, %v744
    %v997 = vpack.c.b16 %v749, %v745
    %v998 = vpack.c.b16 %v754, %v750
    %v999 = vpack.c.b16 %v755, %v751
    %v1000 = vpack.c.b16 %v756, %v752
    %v1001 = vpack.c.b16 %v757, %v753
    %v1002 = vpack.c.b16 %v762, %v758
    %v1003 = vpack.c.b16 %v763, %v759
    %v1004 = vpack.c.b16 %v764, %v760
    %v1005 = vpack.c.b16 %v765, %v761
    %v1006 = vpack.c.b16 %v770, %v766
    %v1007 = vpack.c.b16 %v771, %v767
    %v1008 = vpack.c.b16 %v772, %v768
    %v1009 = vpack.c.b16 %v773, %v769
    %v1010 = vpack.c.b16 %v778, %v774
    %v1011 = vpack.c.b16 %v779, %v775
    %v1012 = vpack.c.b16 %v780, %v776
    %v1013 = vpack.c.b16 %v781, %v777
    %v1014 = vpack.c.b16 %v786, %v782
    %v1015 = vpack.c.b16 %v787, %v783
    %v1016 = vpack.c.b16 %v788, %v784
    %v1017 = vpack.c.b16 %v789, %v785
    %v1018 = vpack.c.b16 %v794, %v790
    %v1019 = vpack.c.b16 %v795, %v791
    %v1020 = vpack.c.b16 %v796, %v792
    %v1021 = vpack.c.b16 %v797, %v793
    %v1022 = vpack.c.b16 %v802, %v798
    %v1023 = vpack.c.b16 %v803, %v799
    %v1024 = vpack.c.b16 %v804, %v800
    %v1025 = vpack.c.b16 %v805, %v801
    %v1026 = vpack.c.b16 %v810, %v806
    %v1027 = vpack.c.b16 %v811, %v807
    %v1028 = vpack.c.b16 %v812, %v808
    %v1029 = vpack.c.b16 %v813, %v809
    %v1030 = vpack.c.b16 %v818, %v814
    %v1031 = vpack.c.b16 %v819, %v815
    %v1032 = vpack.c.b16 %v820, %v816
    %v1033 = vpack.c.b16 %v821, %v817
    %v1034 = vpack.c.b16 %v826, %v822
    %v1035 = vpack.c.b16 %v827, %v823
    %v1036 = vpack.c.b16 %v828, %v824
    %v1037 = vpack.c.b16 %v829, %v825
    %v1038 = vpack.c.b16 %v834, %v830
    %v1039 = vpack.c.b16 %v835, %v831
    %v1040 = vpack.c.b16 %v836, %v832
    %v1041 = vpack.c.b16 %v837, %v833
    %v1042 = vpack.c.b16 %v842, %v838
    %v1043 = vpack.c.b16 %v843, %v839
    %v1044 = vpack.c.b16 %v844, %v840
    %v1045 = vpack.c.b16 %v845, %v841
    %v1046 = vpack.c.b16 %v850, %v846
    %v1047 = vpack.c.b16 %v851, %v847
    %v1048 = vpack.c.b16 %v852, %v848
    %v1049 = vpack.c.b16 %v853, %v849
    %v1050 = vpack.c.b16 %v858, %v854
    %v1051 = vpack.c.b16 %v859, %v855
    %v1052 = vpack.c.b16 %v860, %v856
    %v1053 = vpack.c.b16 %v861, %v857
    %1246 = vmatprep.subr.bf16.mxu0 %v863
    %1247 = vmatpush1.bf16.msra.mxu0 %v862
    %1248 = vmatprep.subr.bf16.mxu0 %v867
    %1249 = vmatpush1.bf16.msra.mxu0 %v866
    %1250 = vmatprep.subr.bf16.mxu0 %v871
    %1251 = vmatpush1.bf16.msra.mxu0 %v870
    %1252 = vmatprep.subr.bf16.mxu0 %v875
    %1253 = vmatpush1.bf16.msra.mxu0 %v874
    %1254 = vmatprep.subr.bf16.mxu0 %v879
    %1255 = vmatpush1.bf16.msra.mxu0 %v878
    %1256 = vmatprep.subr.bf16.mxu0 %v883
    %1257 = vmatpush1.bf16.msra.mxu0 %v882
    %1258 = vmatprep.subr.bf16.mxu0 %v887
    %1259 = vmatpush1.bf16.msra.mxu0 %v886
    %1260 = vmatprep.subr.bf16.mxu0 %v891
    %1261 = vmatpush1.bf16.msra.mxu0 %v890
    %1262 = vmatprep.subr.bf16.mxu0 %v895
    %1263 = vmatpush1.bf16.msra.mxu0 %v894
    %1264 = vmatprep.subr.bf16.mxu0 %v899
    %1265 = vmatpush1.bf16.msra.mxu0 %v898
    %1266 = vmatprep.subr.bf16.mxu0 %v903
    %1267 = vmatpush1.bf16.msra.mxu0 %v902
    %1268 = vmatprep.subr.bf16.mxu0 %v907
    %1269 = vmatpush1.bf16.msra.mxu0 %v906
    %1270 = vmatprep.subr.bf16.mxu0 %v911
    %1271 = vmatpush1.bf16.msra.mxu0 %v910
    %1272 = vmatprep.subr.bf16.mxu0 %v915
    %1273 = vmatpush1.bf16.msra.mxu0 %v914
    %1274 = vmatprep.subr.bf16.mxu0 %v919
    %1275 = vmatpush1.bf16.msra.mxu0 %v918
    %1276 = vmatprep.subr.bf16.mxu0 %v923
    %1277 = vmatpush1.bf16.msra.mxu0 %v922
    %1278 = vmatprep.mubr.bf16.mxu0 %v67
    %1279 = vmatmul.mubr.bf16.gmra.mrb[0].mxu0 %v66
    %v1280 = vpop.f32.mrb[0].mxu0
    %v1281 = vadd.f32 %v269, %v1280
    %v1282 = vpop.f32.mrb[0].mxu0
    %v1283 = vadd.f32 %v273, %v1282
    %v1284 = vpop.f32.mrb[0].mxu0
    %v1285 = vpop.f32.mrb[0].mxu0
    %1286 = vdwg.mxu0
    %1287 = vmatprep.subr.bf16.mxu0 %v927
    %1288 = vmatpush1.bf16.msra.mxu0 %v926
    %1289 = vmatprep.subr.bf16.mxu0 %v931
    %1290 = vmatpush1.bf16.msra.mxu0 %v930
    %1291 = vmatprep.subr.bf16.mxu0 %v935
    %1292 = vmatpush1.bf16.msra.mxu0 %v934
    %1293 = vmatprep.subr.bf16.mxu0 %v939
    %1294 = vmatpush1.bf16.msra.mxu0 %v938
    %1295 = vmatprep.subr.bf16.mxu0 %v943
    %1296 = vmatpush1.bf16.msra.mxu0 %v942
    %1297 = vmatprep.subr.bf16.mxu0 %v947
    %1298 = vmatpush1.bf16.msra.mxu0 %v946
    %1299 = vmatprep.subr.bf16.mxu0 %v951
    %1300 = vmatpush1.bf16.msra.mxu0 %v950
    %1301 = vmatprep.subr.bf16.mxu0 %v955
    %1302 = vmatpush1.bf16.msra.mxu0 %v954
    %1303 = vmatprep.subr.bf16.mxu0 %v959
    %1304 = vmatpush1.bf16.msra.mxu0 %v958
    %1305 = vmatprep.subr.bf16.mxu0 %v963
    %1306 = vmatpush1.bf16.msra.mxu0 %v962
    %1307 = vmatprep.subr.bf16.mxu0 %v967
    %1308 = vmatpush1.bf16.msra.mxu0 %v966
    %1309 = vmatprep.subr.bf16.mxu0 %v971
    %1310 = vmatpush1.bf16.msra.mxu0 %v970
    %1311 = vmatprep.subr.bf16.mxu0 %v975
    %1312 = vmatpush1.bf16.msra.mxu0 %v974
    %1313 = vmatprep.subr.bf16.mxu0 %v979
    %1314 = vmatpush1.bf16.msra.mxu0 %v978
    %1315 = vmatprep.subr.bf16.mxu0 %v983
    %1316 = vmatpush1.bf16.msra.mxu0 %v982
    %1317 = vmatprep.subr.bf16.mxu0 %v987
    %1318 = vmatpush1.bf16.msra.mxu0 %v986
    %1319 = vmatprep.mubr.bf16.mxu0 %v69
    %1320 = vmatmul.mubr.bf16.gmra.mrb[0].mxu0 %v68
    %v1321 = vpop.f32.mrb[0].mxu0
    %v1322 = vadd.f32 %v1281, %v1321
    %v1323 = vpop.f32.mrb[0].mxu0
    %v1324 = vadd.f32 %v1283, %v1323
    %v1325 = vpop.f32.mrb[0].mxu0
    %v1326 = vpop.f32.mrb[0].mxu0
    %1327 = vdwg.mxu0
    %1328 = vmatprep.subr.bf16.mxu0 %v991
    %1329 = vmatpush1.bf16.msra.mxu0 %v990
    %1330 = vmatprep.subr.bf16.mxu0 %v995
    %1331 = vmatpush1.bf16.msra.mxu0 %v994
    %1332 = vmatprep.subr.bf16.mxu0 %v999
    %1333 = vmatpush1.bf16.msra.mxu0 %v998
    %1334 = vmatprep.subr.bf16.mxu0 %v1003
    %1335 = vmatpush1.bf16.msra.mxu0 %v1002
    %1336 = vmatprep.subr.bf16.mxu0 %v1007
    %1337 = vmatpush1.bf16.msra.mxu0 %v1006
    %1338 = vmatprep.subr.bf16.mxu0 %v1011
    %1339 = vmatpush1.bf16.msra.mxu0 %v1010
    %1340 = vmatprep.subr.bf16.mxu0 %v1015
    %1341 = vmatpush1.bf16.msra.mxu0 %v1014
    %1342 = vmatprep.subr.bf16.mxu0 %v1019
    %1343 = vmatpush1.bf16.msra.mxu0 %v1018
    %1344 = vmatprep.subr.bf16.mxu0 %v1023
    %1345 = vmatpush1.bf16.msra.mxu0 %v1022
    %1346 = vmatprep.subr.bf16.mxu0 %v1027
    %1347 = vmatpush1.bf16.msra.mxu0 %v1026
    %1348 = vmatprep.subr.bf16.mxu0 %v1031
    %1349 = vmatpush1.bf16.msra.mxu0 %v1030
    %1350 = vmatprep.subr.bf16.mxu0 %v1035
    %1351 = vmatpush1.bf16.msra.mxu0 %v1034
    %1352 = vmatprep.subr.bf16.mxu0 %v1039
    %1353 = vmatpush1.bf16.msra.mxu0 %v1038
    %1354 = vmatprep.subr.bf16.mxu0 %v1043
    %1355 = vmatpush1.bf16.msra.mxu0 %v1042
    %1356 = vmatprep.subr.bf16.mxu0 %v1047
    %1357 = vmatpush1.bf16.msra.mxu0 %v1046
    %1358 = vmatprep.subr.bf16.mxu0 %v1051
    %1359 = vmatpush1.bf16.msra.mxu0 %v1050
    %1360 = vmatprep.mubr.bf16.mxu0 %v71
    %1361 = vmatmul.mubr.bf16.gmra.mrb[0].mxu0 %v70
    %v1362 = vpop.f32.mrb[0].mxu0
    %v1363 = vadd.f32 %v1322, %v1362
    %v1364 = vpop.f32.mrb[0].mxu0
    %v1365 = vadd.f32 %v1324, %v1364
    %v1366 = vpop.f32.mrb[0].mxu0
    %v1367 = vpop.f32.mrb[0].mxu0
    %1368 = vdwg.mxu0
    %1369 = vmatprep.subr.bf16.mxu0 %v865
    %1370 = vmatpush1.bf16.msra.mxu0 %v864
    %1371 = vmatprep.subr.bf16.mxu0 %v869
    %1372 = vmatpush1.bf16.msra.mxu0 %v868
    %1373 = vmatprep.subr.bf16.mxu0 %v873
    %1374 = vmatpush1.bf16.msra.mxu0 %v872
    %1375 = vmatprep.subr.bf16.mxu0 %v877
    %1376 = vmatpush1.bf16.msra.mxu0 %v876
    %1377 = vmatprep.subr.bf16.mxu0 %v881
    %1378 = vmatpush1.bf16.msra.mxu0 %v880
    %1379 = vmatprep.subr.bf16.mxu0 %v885
    %1380 = vmatpush1.bf16.msra.mxu0 %v884
    %1381 = vmatprep.subr.bf16.mxu0 %v889
    %1382 = vmatpush1.bf16.msra.mxu0 %v888
    %1383 = vmatprep.subr.bf16.mxu0 %v893
    %1384 = vmatpush1.bf16.msra.mxu0 %v892
    %1385 = vmatprep.subr.bf16.mxu0 %v897
    %1386 = vmatpush1.bf16.msra.mxu0 %v896
    %1387 = vmatprep.subr.bf16.mxu0 %v901
    %1388 = vmatpush1.bf16.msra.mxu0 %v900
    %1389 = vmatprep.subr.bf16.mxu0 %v905
    %1390 = vmatpush1.bf16.msra.mxu0 %v904
    %1391 = vmatprep.subr.bf16.mxu0 %v909
    %1392 = vmatpush1.bf16.msra.mxu0 %v908
    %1393 = vmatprep.subr.bf16.mxu0 %v913
    %1394 = vmatpush1.bf16.msra.mxu0 %v912
    %1395 = vmatprep.subr.bf16.mxu0 %v917
    %1396 = vmatpush1.bf16.msra.mxu0 %v916
    %1397 = vmatprep.subr.bf16.mxu0 %v921
    %1398 = vmatpush1.bf16.msra.mxu0 %v920
    %1399 = vmatprep.subr.bf16.mxu0 %v925
    %1400 = vmatpush1.bf16.msra.mxu0 %v924
    %1401 = vmatprep.mubr.bf16.mxu0 %v67
    %1402 = vmatmul.mubr.bf16.gmra.mrb[0].mxu0 %v66
    %v1403 = vpop.f32.mrb[0].mxu0
    %v1404 = vadd.f32 %v277, %v1403
    %v1405 = vpop.f32.mrb[0].mxu0
    %v1406 = vadd.f32 %v281, %v1405
    %v1407 = vpop.f32.mrb[0].mxu0
    %v1408 = vpop.f32.mrb[0].mxu0
    %1409 = vdwg.mxu0
    %1410 = vmatprep.subr.bf16.mxu0 %v929
    %1411 = vmatpush1.bf16.msra.mxu0 %v928
    %1412 = vmatprep.subr.bf16.mxu0 %v933
    %1413 = vmatpush1.bf16.msra.mxu0 %v932
    %1414 = vmatprep.subr.bf16.mxu0 %v937
    %1415 = vmatpush1.bf16.msra.mxu0 %v936
    %1416 = vmatprep.subr.bf16.mxu0 %v941
    %1417 = vmatpush1.bf16.msra.mxu0 %v940
    %1418 = vmatprep.subr.bf16.mxu0 %v945
    %1419 = vmatpush1.bf16.msra.mxu0 %v944
    %1420 = vmatprep.subr.bf16.mxu0 %v949
    %1421 = vmatpush1.bf16.msra.mxu0 %v948
    %1422 = vmatprep.subr.bf16.mxu0 %v953
    %1423 = vmatpush1.bf16.msra.mxu0 %v952
    %1424 = vmatprep.subr.bf16.mxu0 %v957
    %1425 = vmatpush1.bf16.msra.mxu0 %v956
    %1426 = vmatprep.subr.bf16.mxu0 %v961
    %1427 = vmatpush1.bf16.msra.mxu0 %v960
    %1428 = vmatprep.subr.bf16.mxu0 %v965
    %1429 = vmatpush1.bf16.msra.mxu0 %v964
    %1430 = vmatprep.subr.bf16.mxu0 %v969
    %1431 = vmatpush1.bf16.msra.mxu0 %v968
    %1432 = vmatprep.subr.bf16.mxu0 %v973
    %1433 = vmatpush1.bf16.msra.mxu0 %v972
    %1434 = vmatprep.subr.bf16.mxu0 %v977
    %1435 = vmatpush1.bf16.msra.mxu0 %v976
    %1436 = vmatprep.subr.bf16.mxu0 %v981
    %1437 = vmatpush1.bf16.msra.mxu0 %v980
    %1438 = vmatprep.subr.bf16.mxu0 %v985
    %1439 = vmatpush1.bf16.msra.mxu0 %v984
    %1440 = vmatprep.subr.bf16.mxu0 %v989
    %1441 = vmatpush1.bf16.msra.mxu0 %v988
    %1442 = vmatprep.mubr.bf16.mxu0 %v69
    %1443 = vmatmul.mubr.bf16.gmra.mrb[0].mxu0 %v68
    %v1444 = vpop.f32.mrb[0].mxu0
    %v1445 = vadd.f32 %v1404, %v1444
    %v1446 = vpop.f32.mrb[0].mxu0
    %v1447 = vadd.f32 %v1406, %v1446
    %v1448 = vpop.f32.mrb[0].mxu0
    %v1449 = vpop.f32.mrb[0].mxu0
    %1450 = vdwg.mxu0
    %1451 = vmatprep.subr.bf16.mxu0 %v993
    %1452 = vmatpush1.bf16.msra.mxu0 %v992
    %1453 = vmatprep.subr.bf16.mxu0 %v997
    %1454 = vmatpush1.bf16.msra.mxu0 %v996
    %1455 = vmatprep.subr.bf16.mxu0 %v1001
    %1456 = vmatpush1.bf16.msra.mxu0 %v1000
    %1457 = vmatprep.subr.bf16.mxu0 %v1005
    %1458 = vmatpush1.bf16.msra.mxu0 %v1004
    %1459 = vmatprep.subr.bf16.mxu0 %v1009
    %1460 = vmatpush1.bf16.msra.mxu0 %v1008
    %1461 = vmatprep.subr.bf16.mxu0 %v1013
    %1462 = vmatpush1.bf16.msra.mxu0 %v1012
    %1463 = vmatprep.subr.bf16.mxu0 %v1017
    %1464 = vmatpush1.bf16.msra.mxu0 %v1016
    %1465 = vmatprep.subr.bf16.mxu0 %v1021
    %1466 = vmatpush1.bf16.msra.mxu0 %v1020
    %1467 = vmatprep.subr.bf16.mxu0 %v1025
    %1468 = vmatpush1.bf16.msra.mxu0 %v1024
    %1469 = vmatprep.subr.bf16.mxu0 %v1029
    %1470 = vmatpush1.bf16.msra.mxu0 %v1028
    %1471 = vmatprep.subr.bf16.mxu0 %v1033
    %1472 = vmatpush1.bf16.msra.mxu0 %v1032
    %1473 = vmatprep.subr.bf16.mxu0 %v1037
    %1474 = vmatpush1.bf16.msra.mxu0 %v1036
    %1475 = vmatprep.subr.bf16.mxu0 %v1041
    %1476 = vmatpush1.bf16.msra.mxu0 %v1040
    %1477 = vmatprep.subr.bf16.mxu0 %v1045
    %1478 = vmatpush1.bf16.msra.mxu0 %v1044
    %1479 = vmatprep.subr.bf16.mxu0 %v1049
    %1480 = vmatpush1.bf16.msra.mxu0 %v1048
    %1481 = vmatprep.subr.bf16.mxu0 %v1053
    %1482 = vmatpush1.bf16.msra.mxu0 %v1052
    %1483 = vmatprep.mubr.bf16.mxu0 %v71
    %1484 = vmatmul.mubr.bf16.gmra.mrb[0].mxu0 %v70
    %v1485 = vpop.f32.mrb[0].mxu0
    %v1486 = vadd.f32 %v1445, %v1485
    %v1487 = vpop.f32.mrb[0].mxu0
    %v1488 = vadd.f32 %v1447, %v1487
    %v1489 = vpop.f32.mrb[0].mxu0
    %v1490 = vpop.f32.mrb[0].mxu0
    %1491 = vdwg.mxu0
    %v1492 = vmax.f32 %v1363, 0.0
    %v1493 = vmax.f32 %v1365, 0.0
    %v1494 = vmax.f32 %v1486, 0.0
    %v1495 = vmax.f32 %v1488, 0.0
    %v1496 = vpack.c.bf16 %v1492, %v1492
    %v1497 = vpack.c.bf16 %v1493, %v1493
    %v1498 = vpack.c.bf16 %v1494, %v1494
    %v1499 = vpack.c.bf16 %v1495, %v1495
    %v1500 = vld [vmem:[#allocation7] sm:$0xff]
    %v1501 = vld [vmem:[#allocation7 + $0x8] sm:$0xff]
    %v1502 = vld [vmem:[#allocation7 + $0x10] sm:$0xff]
    %v1503 = vld [vmem:[#allocation7 + $0x18] sm:$0xff]
    %v1504 = vld [vmem:[#allocation7 + $0x20] sm:$0xff]
    %v1505 = vld [vmem:[#allocation7 + $0x28] sm:$0xff]
    %v1506 = vld [vmem:[#allocation7 + $0x30] sm:$0xff]
    %v1507 = vld [vmem:[#allocation7 + $0x38] sm:$0xff]
    %v1508 = vld [vmem:[#allocation7 + $0x40] sm:$0xff]
    %v1509 = vld [vmem:[#allocation7 + $0x48] sm:$0xff]
    %v1510 = vld [vmem:[#allocation7 + $0x50] sm:$0xff]
    %v1511 = vld [vmem:[#allocation7 + $0x58] sm:$0xff]
    %v1512 = vld [vmem:[#allocation7 + $0x60] sm:$0xff]
    %v1513 = vld [vmem:[#allocation7 + $0x68] sm:$0xff]
    %v1514 = vld [vmem:[#allocation7 + $0x70] sm:$0xff]
    %v1515 = vld [vmem:[#allocation7 + $0x78] sm:$0xff]
    %v1516 = vld [vmem:[#allocation7 + $0x80] sm:$0xff]
    %v1517 = vld [vmem:[#allocation7 + $0x88] sm:$0xff]
    %v1518 = vld [vmem:[#allocation7 + $0x90] sm:$0xff]
    %v1519 = vld [vmem:[#allocation7 + $0x98] sm:$0xff]
    %v1520 = vld [vmem:[#allocation7 + $0xa0] sm:$0xff]
    %v1521 = vld [vmem:[#allocation7 + $0xa8] sm:$0xff]
    %v1522 = vld [vmem:[#allocation7 + $0xb0] sm:$0xff]
    %v1523 = vld [vmem:[#allocation7 + $0xb8] sm:$0xff]
    %v1524 = vld [vmem:[#allocation7 + $0xc0] sm:$0xff]
    %v1525 = vld [vmem:[#allocation7 + $0xc8] sm:$0xff]
    %v1526 = vld [vmem:[#allocation7 + $0xd0] sm:$0xff]
    %v1527 = vld [vmem:[#allocation7 + $0xd8] sm:$0xff]
    %v1528 = vld [vmem:[#allocation7 + $0xe0] sm:$0xff]
    %v1529 = vld [vmem:[#allocation7 + $0xe8] sm:$0xff]
    %v1530 = vld [vmem:[#allocation7 + $0xf0] sm:$0xff]
    %v1531 = vld [vmem:[#allocation7 + $0xf8] sm:$0xff]
    %v1532 = vld [vmem:[#allocation7 + $0x100] sm:$0xff]
    %v1533 = vld [vmem:[#allocation7 + $0x108] sm:$0xff]
    %v1534 = vld [vmem:[#allocation7 + $0x110] sm:$0xff]
    %v1535 = vld [vmem:[#allocation7 + $0x118] sm:$0xff]
    %v1536 = vld [vmem:[#allocation7 + $0x120] sm:$0xff]
    %v1537 = vld [vmem:[#allocation7 + $0x128] sm:$0xff]
    %v1538 = vld [vmem:[#allocation7 + $0x130] sm:$0xff]
    %v1539 = vld [vmem:[#allocation7 + $0x138] sm:$0xff]
    %v1540 = vld [vmem:[#allocation7 + $0x140] sm:$0xff]
    %v1541 = vld [vmem:[#allocation7 + $0x148] sm:$0xff]
    %v1542 = vld [vmem:[#allocation7 + $0x150] sm:$0xff]
    %v1543 = vld [vmem:[#allocation7 + $0x158] sm:$0xff]
    %v1544 = vld [vmem:[#allocation7 + $0x160] sm:$0xff]
    %v1545 = vld [vmem:[#allocation7 + $0x168] sm:$0xff]
    %v1546 = vld [vmem:[#allocation7 + $0x170] sm:$0xff]
    %v1547 = vld [vmem:[#allocation7 + $0x178] sm:$0xff]
    %v1548 = vld [vmem:[#allocation7 + $0x180] sm:$0xff]
    %v1549 = vld [vmem:[#allocation7 + $0x188] sm:$0xff]
    %v1550 = vld [vmem:[#allocation7 + $0x190] sm:$0xff]
    %v1551 = vld [vmem:[#allocation7 + $0x198] sm:$0xff]
    %v1552 = vld [vmem:[#allocation7 + $0x1a0] sm:$0xff]
    %v1553 = vld [vmem:[#allocation7 + $0x1a8] sm:$0xff]
    %v1554 = vld [vmem:[#allocation7 + $0x1b0] sm:$0xff]
    %v1555 = vld [vmem:[#allocation7 + $0x1b8] sm:$0xff]
    %v1556 = vld [vmem:[#allocation7 + $0x1c0] sm:$0xff]
    %v1557 = vld [vmem:[#allocation7 + $0x1c8] sm:$0xff]
    %v1558 = vld [vmem:[#allocation7 + $0x1d0] sm:$0xff]
    %v1559 = vld [vmem:[#allocation7 + $0x1d8] sm:$0xff]
    %v1560 = vld [vmem:[#allocation7 + $0x1e0] sm:$0xff]
    %v1561 = vld [vmem:[#allocation7 + $0x1e8] sm:$0xff]
    %v1562 = vld [vmem:[#allocation7 + $0x1f0] sm:$0xff]
    %v1563 = vld [vmem:[#allocation7 + $0x1f8] sm:$0xff]
    %v1564 = vld [vmem:[%s4] sm:$0x3]
    %v1566 = vlaneseq
    %v1567 = vshrl.u32 %v1566, 7
    %v1568 = vsub.s32 0, %v1567
    %v1569 = vrot.slane %v1564, %v1568
    %v1570 = vlaneseq
    %v1571 = vshrl.u32 %v1570, 7
    %v1572 = vsub.s32 1, %v1571
    %v1573 = vrot.slane %v1564, %v1572
    %v1640 = vunpack.c.l.b16 %v1500
    %v1641 = vunpack.c.h.b16 %v1500
    %v1642 = vunpack.c.l.b16 %v1501
    %v1643 = vunpack.c.h.b16 %v1501
    %v1644 = vunpack.c.l.b16 %v1502
    %v1645 = vunpack.c.h.b16 %v1502
    %v1646 = vunpack.c.l.b16 %v1503
    %v1647 = vunpack.c.h.b16 %v1503
    %v1648 = vunpack.c.l.b16 %v1504
    %v1649 = vunpack.c.h.b16 %v1504
    %v1650 = vunpack.c.l.b16 %v1505
    %v1651 = vunpack.c.h.b16 %v1505
    %v1652 = vunpack.c.l.b16 %v1506
    %v1653 = vunpack.c.h.b16 %v1506
    %v1654 = vunpack.c.l.b16 %v1507
    %v1655 = vunpack.c.h.b16 %v1507
    %v1656 = vunpack.c.l.b16 %v1508
    %v1657 = vunpack.c.h.b16 %v1508
    %v1658 = vunpack.c.l.b16 %v1509
    %v1659 = vunpack.c.h.b16 %v1509
    %v1660 = vunpack.c.l.b16 %v1510
    %v1661 = vunpack.c.h.b16 %v1510
    %v1662 = vunpack.c.l.b16 %v1511
    %v1663 = vunpack.c.h.b16 %v1511
    %v1664 = vunpack.c.l.b16 %v1512
    %v1665 = vunpack.c.h.b16 %v1512
    %v1666 = vunpack.c.l.b16 %v1513
    %v1667 = vunpack.c.h.b16 %v1513
    %v1668 = vunpack.c.l.b16 %v1514
    %v1669 = vunpack.c.h.b16 %v1514
    %v1670 = vunpack.c.l.b16 %v1515
    %v1671 = vunpack.c.h.b16 %v1515
    %v1672 = vunpack.c.l.b16 %v1516
    %v1673 = vunpack.c.h.b16 %v1516
    %v1674 = vunpack.c.l.b16 %v1517
    %v1675 = vunpack.c.h.b16 %v1517
    %v1676 = vunpack.c.l.b16 %v1518
    %v1677 = vunpack.c.h.b16 %v1518
    %v1678 = vunpack.c.l.b16 %v1519
    %v1679 = vunpack.c.h.b16 %v1519
    %v1680 = vunpack.c.l.b16 %v1520
    %v1681 = vunpack.c.h.b16 %v1520
    %v1682 = vunpack.c.l.b16 %v1521
    %v1683 = vunpack.c.h.b16 %v1521
    %v1684 = vunpack.c.l.b16 %v1522
    %v1685 = vunpack.c.h.b16 %v1522
    %v1686 = vunpack.c.l.b16 %v1523
    %v1687 = vunpack.c.h.b16 %v1523
    %v1688 = vunpack.c.l.b16 %v1524
    %v1689 = vunpack.c.h.b16 %v1524
    %v1690 = vunpack.c.l.b16 %v1525
    %v1691 = vunpack.c.h.b16 %v1525
    %v1692 = vunpack.c.l.b16 %v1526
    %v1693 = vunpack.c.h.b16 %v1526
    %v1694 = vunpack.c.l.b16 %v1527
    %v1695 = vunpack.c.h.b16 %v1527
    %v1696 = vunpack.c.l.b16 %v1528
    %v1697 = vunpack.c.h.b16 %v1528
    %v1698 = vunpack.c.l.b16 %v1529
    %v1699 = vunpack.c.h.b16 %v1529
    %v1700 = vunpack.c.l.b16 %v1530
    %v1701 = vunpack.c.h.b16 %v1530
    %v1702 = vunpack.c.l.b16 %v1531
    %v1703 = vunpack.c.h.b16 %v1531
    %v1704 = vunpack.c.l.b16 %v1532
    %v1705 = vunpack.c.h.b16 %v1532
    %v1706 = vunpack.c.l.b16 %v1533
    %v1707 = vunpack.c.h.b16 %v1533
    %v1708 = vunpack.c.l.b16 %v1534
    %v1709 = vunpack.c.h.b16 %v1534
    %v1710 = vunpack.c.l.b16 %v1535
    %v1711 = vunpack.c.h.b16 %v1535
    %v1712 = vunpack.c.l.b16 %v1536
    %v1713 = vunpack.c.h.b16 %v1536
    %v1714 = vunpack.c.l.b16 %v1537
    %v1715 = vunpack.c.h.b16 %v1537
    %v1716 = vunpack.c.l.b16 %v1538
    %v1717 = vunpack.c.h.b16 %v1538
    %v1718 = vunpack.c.l.b16 %v1539
    %v1719 = vunpack.c.h.b16 %v1539
    %v1720 = vunpack.c.l.b16 %v1540
    %v1721 = vunpack.c.h.b16 %v1540
    %v1722 = vunpack.c.l.b16 %v1541
    %v1723 = vunpack.c.h.b16 %v1541
    %v1724 = vunpack.c.l.b16 %v1542
    %v1725 = vunpack.c.h.b16 %v1542
    %v1726 = vunpack.c.l.b16 %v1543
    %v1727 = vunpack.c.h.b16 %v1543
    %v1728 = vunpack.c.l.b16 %v1544
    %v1729 = vunpack.c.h.b16 %v1544
    %v1730 = vunpack.c.l.b16 %v1545
    %v1731 = vunpack.c.h.b16 %v1545
    %v1732 = vunpack.c.l.b16 %v1546
    %v1733 = vunpack.c.h.b16 %v1546
    %v1734 = vunpack.c.l.b16 %v1547
    %v1735 = vunpack.c.h.b16 %v1547
    %v1736 = vunpack.c.l.b16 %v1548
    %v1737 = vunpack.c.h.b16 %v1548
    %v1738 = vunpack.c.l.b16 %v1549
    %v1739 = vunpack.c.h.b16 %v1549
    %v1740 = vunpack.c.l.b16 %v1550
    %v1741 = vunpack.c.h.b16 %v1550
    %v1742 = vunpack.c.l.b16 %v1551
    %v1743 = vunpack.c.h.b16 %v1551
    %v1744 = vunpack.c.l.b16 %v1552
    %v1745 = vunpack.c.h.b16 %v1552
    %v1746 = vunpack.c.l.b16 %v1553
    %v1747 = vunpack.c.h.b16 %v1553
    %v1748 = vunpack.c.l.b16 %v1554
    %v1749 = vunpack.c.h.b16 %v1554
    %v1750 = vunpack.c.l.b16 %v1555
    %v1751 = vunpack.c.h.b16 %v1555
    %v1752 = vunpack.c.l.b16 %v1556
    %v1753 = vunpack.c.h.b16 %v1556
    %v1754 = vunpack.c.l.b16 %v1557
    %v1755 = vunpack.c.h.b16 %v1557
    %v1756 = vunpack.c.l.b16 %v1558
    %v1757 = vunpack.c.h.b16 %v1558
    %v1758 = vunpack.c.l.b16 %v1559
    %v1759 = vunpack.c.h.b16 %v1559
    %v1760 = vunpack.c.l.b16 %v1560
    %v1761 = vunpack.c.h.b16 %v1560
    %v1762 = vunpack.c.l.b16 %v1561
    %v1763 = vunpack.c.h.b16 %v1561
    %v1764 = vunpack.c.l.b16 %v1562
    %v1765 = vunpack.c.h.b16 %v1562
    %v1766 = vunpack.c.l.b16 %v1563
    %v1767 = vunpack.c.h.b16 %v1563
    %v1768 = vpack.c.b16 %v1642, %v1640
    %v1769 = vpack.c.b16 %v1643, %v1641
    %v1770 = vpack.c.b16 %v1646, %v1644
    %v1771 = vpack.c.b16 %v1647, %v1645
    %v1772 = vpack.c.b16 %v1650, %v1648
    %v1773 = vpack.c.b16 %v1651, %v1649
    %v1774 = vpack.c.b16 %v1654, %v1652
    %v1775 = vpack.c.b16 %v1655, %v1653
    %v1776 = vpack.c.b16 %v1658, %v1656
    %v1777 = vpack.c.b16 %v1659, %v1657
    %v1778 = vpack.c.b16 %v1662, %v1660
    %v1779 = vpack.c.b16 %v1663, %v1661
    %v1780 = vpack.c.b16 %v1666, %v1664
    %v1781 = vpack.c.b16 %v1667, %v1665
    %v1782 = vpack.c.b16 %v1670, %v1668
    %v1783 = vpack.c.b16 %v1671, %v1669
    %v1784 = vpack.c.b16 %v1674, %v1672
    %v1785 = vpack.c.b16 %v1675, %v1673
    %v1786 = vpack.c.b16 %v1678, %v1676
    %v1787 = vpack.c.b16 %v1679, %v1677
    %v1788 = vpack.c.b16 %v1682, %v1680
    %v1789 = vpack.c.b16 %v1683, %v1681
    %v1790 = vpack.c.b16 %v1686, %v1684
    %v1791 = vpack.c.b16 %v1687, %v1685
    %v1792 = vpack.c.b16 %v1690, %v1688
    %v1793 = vpack.c.b16 %v1691, %v1689
    %v1794 = vpack.c.b16 %v1694, %v1692
    %v1795 = vpack.c.b16 %v1695, %v1693
    %v1796 = vpack.c.b16 %v1698, %v1696
    %v1797 = vpack.c.b16 %v1699, %v1697
    %v1798 = vpack.c.b16 %v1702, %v1700
    %v1799 = vpack.c.b16 %v1703, %v1701
    %v1800 = vpack.c.b16 %v1706, %v1704
    %v1801 = vpack.c.b16 %v1707, %v1705
    %v1802 = vpack.c.b16 %v1710, %v1708
    %v1803 = vpack.c.b16 %v1711, %v1709
    %v1804 = vpack.c.b16 %v1714, %v1712
    %v1805 = vpack.c.b16 %v1715, %v1713
    %v1806 = vpack.c.b16 %v1718, %v1716
    %v1807 = vpack.c.b16 %v1719, %v1717
    %v1808 = vpack.c.b16 %v1722, %v1720
    %v1809 = vpack.c.b16 %v1723, %v1721
    %v1810 = vpack.c.b16 %v1726, %v1724
    %v1811 = vpack.c.b16 %v1727, %v1725
    %v1812 = vpack.c.b16 %v1730, %v1728
    %v1813 = vpack.c.b16 %v1731, %v1729
    %v1814 = vpack.c.b16 %v1734, %v1732
    %v1815 = vpack.c.b16 %v1735, %v1733
    %v1816 = vpack.c.b16 %v1738, %v1736
    %v1817 = vpack.c.b16 %v1739, %v1737
    %v1818 = vpack.c.b16 %v1742, %v1740
    %v1819 = vpack.c.b16 %v1743, %v1741
    %v1820 = vpack.c.b16 %v1746, %v1744
    %v1821 = vpack.c.b16 %v1747, %v1745
    %v1822 = vpack.c.b16 %v1750, %v1748
    %v1823 = vpack.c.b16 %v1751, %v1749
    %v1824 = vpack.c.b16 %v1754, %v1752
    %v1825 = vpack.c.b16 %v1755, %v1753
    %v1826 = vpack.c.b16 %v1758, %v1756
    %v1827 = vpack.c.b16 %v1759, %v1757
    %v1828 = vpack.c.b16 %v1762, %v1760
    %v1829 = vpack.c.b16 %v1763, %v1761
    %v1830 = vpack.c.b16 %v1766, %v1764
    %v1831 = vpack.c.b16 %v1767, %v1765
    %1896 = vmatprep.subr.bf16.mxu0 %v1769
    %1897 = vmatpush1.bf16.msra.mxu0 %v1768
    %1898 = vmatprep.subr.bf16.mxu0 %v1771
    %1899 = vmatpush1.bf16.msra.mxu0 %v1770
    %1900 = vmatprep.subr.bf16.mxu0 %v1773
    %1901 = vmatpush1.bf16.msra.mxu0 %v1772
    %1902 = vmatprep.subr.bf16.mxu0 %v1775
    %1903 = vmatpush1.bf16.msra.mxu0 %v1774
    %1904 = vmatprep.subr.bf16.mxu0 %v1777
    %1905 = vmatpush1.bf16.msra.mxu0 %v1776
    %1906 = vmatprep.subr.bf16.mxu0 %v1779
    %1907 = vmatpush1.bf16.msra.mxu0 %v1778
    %1908 = vmatprep.subr.bf16.mxu0 %v1781
    %1909 = vmatpush1.bf16.msra.mxu0 %v1780
    %1910 = vmatprep.subr.bf16.mxu0 %v1783
    %1911 = vmatpush1.bf16.msra.mxu0 %v1782
    %1912 = vmatprep.subr.bf16.mxu0 %v1785
    %1913 = vmatpush1.bf16.msra.mxu0 %v1784
    %1914 = vmatprep.subr.bf16.mxu0 %v1787
    %1915 = vmatpush1.bf16.msra.mxu0 %v1786
    %1916 = vmatprep.subr.bf16.mxu0 %v1789
    %1917 = vmatpush1.bf16.msra.mxu0 %v1788
    %1918 = vmatprep.subr.bf16.mxu0 %v1791
    %1919 = vmatpush1.bf16.msra.mxu0 %v1790
    %1920 = vmatprep.subr.bf16.mxu0 %v1793
    %1921 = vmatpush1.bf16.msra.mxu0 %v1792
    %1922 = vmatprep.subr.bf16.mxu0 %v1795
    %1923 = vmatpush1.bf16.msra.mxu0 %v1794
    %1924 = vmatprep.subr.bf16.mxu0 %v1797
    %1925 = vmatpush1.bf16.msra.mxu0 %v1796
    %1926 = vmatprep.subr.bf16.mxu0 %v1799
    %1927 = vmatpush1.bf16.msra.mxu0 %v1798
    %1928 = vmatprep.mubr.bf16.mxu0 %v1497
    %1929 = vmatmul.mubr.bf16.gmra.mrb[0].mxu0 %v1496
    %v1930 = vpop.f32.mrb[0].mxu0
    %v1931 = vadd.f32 %v1569, %v1930
    %v1932 = vpop.f32.mrb[0].mxu0
    %v1933 = vadd.f32 %v1573, %v1932
    %v1934 = vpop.f32.mrb[0].mxu0
    %v1935 = vpop.f32.mrb[0].mxu0
    %1936 = vdwg.mxu0
    %1937 = vmatprep.subr.bf16.mxu0 %v1801
    %1938 = vmatpush1.bf16.msra.mxu0 %v1800
    %1939 = vmatprep.subr.bf16.mxu0 %v1803
    %1940 = vmatpush1.bf16.msra.mxu0 %v1802
    %1941 = vmatprep.subr.bf16.mxu0 %v1805
    %1942 = vmatpush1.bf16.msra.mxu0 %v1804
    %1943 = vmatprep.subr.bf16.mxu0 %v1807
    %1944 = vmatpush1.bf16.msra.mxu0 %v1806
    %1945 = vmatprep.subr.bf16.mxu0 %v1809
    %1946 = vmatpush1.bf16.msra.mxu0 %v1808
    %1947 = vmatprep.subr.bf16.mxu0 %v1811
    %1948 = vmatpush1.bf16.msra.mxu0 %v1810
    %1949 = vmatprep.subr.bf16.mxu0 %v1813
    %1950 = vmatpush1.bf16.msra.mxu0 %v1812
    %1951 = vmatprep.subr.bf16.mxu0 %v1815
    %1952 = vmatpush1.bf16.msra.mxu0 %v1814
    %1953 = vmatprep.subr.bf16.mxu0 %v1817
    %1954 = vmatpush1.bf16.msra.mxu0 %v1816
    %1955 = vmatprep.subr.bf16.mxu0 %v1819
    %1956 = vmatpush1.bf16.msra.mxu0 %v1818
    %1957 = vmatprep.subr.bf16.mxu0 %v1821
    %1958 = vmatpush1.bf16.msra.mxu0 %v1820
    %1959 = vmatprep.subr.bf16.mxu0 %v1823
    %1960 = vmatpush1.bf16.msra.mxu0 %v1822
    %1961 = vmatprep.subr.bf16.mxu0 %v1825
    %1962 = vmatpush1.bf16.msra.mxu0 %v1824
    %1963 = vmatprep.subr.bf16.mxu0 %v1827
    %1964 = vmatpush1.bf16.msra.mxu0 %v1826
    %1965 = vmatprep.subr.bf16.mxu0 %v1829
    %1966 = vmatpush1.bf16.msra.mxu0 %v1828
    %1967 = vmatprep.subr.bf16.mxu0 %v1831
    %1968 = vmatpush1.bf16.msra.mxu0 %v1830
    %1969 = vmatprep.mubr.bf16.mxu0 %v1499
    %1970 = vmatmul.mubr.bf16.gmra.mrb[0].mxu0 %v1498
    %v1971 = vpop.f32.mrb[0].mxu0
    %v1972 = vadd.f32 %v1931, %v1971
    %v1973 = vpop.f32.mrb[0].mxu0
    %v1974 = vadd.f32 %v1933, %v1973
    %v1975 = vpop.f32.mrb[0].mxu0
    %v1976 = vpop.f32.mrb[0].mxu0
    %1977 = vdwg.mxu0
    %1978 = vst [vmem:[#allocation8] sm:$0xff] %v1972
    %1979 = vst [vmem:[#allocation8 + $0x8] sm:$0xff] %v1974
    // Predicated region
    $region34: #{embedding_network_forward.1} parent=1 // pred_check
      _
    $region35: #{embedding_network_forward.1} parent=1 // pred_check_branch
      %1981 = sbr.rel (0) target = $region37
    $region36: #{embedding_network_forward.1} parent=1 // pred_region
      %s1983 = ssub.s32 256, 256
      %1984 = vsyncadd [#allocation4], %s1983
      %s1986 = sshll.u32 [#allocation8], 4
      %s1987 = int_to_ptr.vmem [resolvable:$true] %s1986
      %1989 = dma.vmem_to_hbm [thread:$0]  %s1987, 256, %s5, [#allocation4]
    $region37: #{embedding_network_forward.1} parent=1 // pred_fallthru
      _
    // Predicated region
    $region38: #{embedding_network_forward.1} parent=1 // pred_check
      _
    $region39: #{embedding_network_forward.1} parent=1 // pred_check_branch
      %1991 = sbr.rel (0) target = $region41
    $region40: #{embedding_network_forward.1} parent=1 // pred_region
      %1992 = dma.done [#allocation4], 256
    $region41: #{embedding_network_forward.1} parent=1 // pred_fallthru
      _
    %1993 = vsyncpa [#allocation3], 1
    %1994 = vsyncpa [#allocation6], 1
    %1995 = vsyncpa [#allocation4], 1

</llo_original>
